<compile_context>
chip_gen: v6e
topology: v6e:2x2x1
jax: 0.10.0
libtpu: 0.0.40
codegen_flags: <defaults>
</compile_context>

<pallas_src>
import functools

import jax
import jax.numpy as jnp
from jax import lax
from jax.experimental import pallas as pl
from jax.experimental.pallas import tpu as pltpu

LN_EPS = 1e-5                      # PyTorch nn.LayerNorm default
_INV_SQRT2 = 0.7071067811865476    # 1/sqrt(2)


def _round_up(x, m):
    return ((x + m - 1) // m) * m


def _vmem_capacity_bytes():
    # Generation-aware VMEM capacity (64 MiB/TC on v7x, 128 MiB on v5e/v6e).
    try:
        return int(pltpu.get_tpu_info().vmem_capacity_bytes)
    except Exception:
        return 64 << 20            # conservative fallback (v7x per-TC)


def _gelu_exact(x):
    # PyTorch nn.GELU() default is the exact erf form.
    # TODO(synk): on v5e, if the VALU slot saturates, switch to tanh-approx GELU (EUP).
    return 0.5 * x * (1.0 + lax.erf(x * _INV_SQRT2))


def _layer_norm(x, gamma, beta):
    mu = jnp.mean(x, axis=-1, keepdims=True)
    xc = x - mu
    var = jnp.mean(xc * xc, axis=-1, keepdims=True)
    return xc * lax.rsqrt(var + LN_EPS) * gamma + beta


def embedder_kernel(
    x_ref,
    ln1_g_ref, ln1_b_ref,
    w1_ref, b1_ref,
    w2_ref, b2_ref,
    ln2_g_ref, ln2_b_ref,
    w3_ref, b3_ref,
    w4_ref, b4_ref,
    o_ref,
    h_ref,
):
    # Heavy hidden-MLP chain runs once per row tile (column axis j is innermost).
    @pl.when(pl.program_id(1) == 0)
    def _():
        x = x_ref[...].astype(jnp.float32)                              # (tile_m, D)
        h = _layer_norm(x, ln1_g_ref[...], ln1_b_ref[...])              # layer_norm
        h = jnp.dot(h.astype(jnp.bfloat16), w1_ref[...],
                    preferred_element_type=jnp.float32) + b1_ref[...]   # fc1
        h = _gelu_exact(h)                                              # gelu
        h = jnp.dot(h.astype(jnp.bfloat16), w2_ref[...],
                    preferred_element_type=jnp.float32) + b2_ref[...]   # fc2
        h = _layer_norm(h, ln2_g_ref[...], ln2_b_ref[...])              # layer_norm2
        h = jnp.dot(h.astype(jnp.bfloat16), w3_ref[...],
                    preferred_element_type=jnp.float32) + b3_ref[...]   # fc3
        h = _gelu_exact(h)                                              # gelu2
        h_ref[...] = h.astype(jnp.bfloat16)                             # persist (tile_m, mid)

    # fc4 on a streamed (mid, tile_n) weight slab; f32 accumulation, bf16 store.
    out = jnp.dot(h_ref[...], w4_ref[...],
                  preferred_element_type=jnp.float32) + b4_ref[...]
    o_ref[...] = out.astype(o_ref.dtype)


def prepare_params(params, *, num_output_tokens, output_dim,
                   tile_n_cap=2048, mxu_align=256):
    """One-time param prep (hoisted out of the per-call path): bf16 weight cast,
    (1, N) bias/LN reshape, 256-aligned padding of the fc4 output dim, and the
    fc4 column-tile size. Returns (arrays_dict, static_meta_dict)."""
    out_total = output_dim * num_output_tokens
    out_pad0 = _round_up(out_total, mxu_align)
    if out_pad0 <= tile_n_cap:
        tile_n = out_pad0
        out_pad = out_pad0
    else:
        tile_n = _round_up(tile_n_cap, mxu_align)
        out_pad = _round_up(out_total, tile_n)

    w4 = params["w4"]
    b4 = params["b4"]
    if out_pad != out_total:
        w4 = jnp.pad(w4, ((0, 0), (0, out_pad - out_total)))
        b4 = jnp.pad(b4, ((0, out_pad - out_total),))

    prep = {
        "ln1_g": params["ln1_g"].reshape(1, -1).astype(jnp.float32),
        "ln1_b": params["ln1_b"].reshape(1, -1).astype(jnp.float32),
        "w1": params["w1"].astype(jnp.bfloat16),
        "b1": params["b1"].reshape(1, -1).astype(jnp.float32),
        "w2": params["w2"].astype(jnp.bfloat16),
        "b2": params["b2"].reshape(1, -1).astype(jnp.float32),
        "ln2_g": params["ln2_g"].reshape(1, -1).astype(jnp.float32),
        "ln2_b": params["ln2_b"].reshape(1, -1).astype(jnp.float32),
        "w3": params["w3"].astype(jnp.bfloat16),
        "b3": params["b3"].reshape(1, -1).astype(jnp.float32),
        "w4": w4.astype(jnp.bfloat16),
        "b4": b4.reshape(1, -1).astype(jnp.float32),
    }
    meta = {"out_total": out_total, "out_pad": out_pad, "tile_n": tile_n}
    return prep, meta


def embedder_forward(x, prep, meta, *, num_output_tokens, output_dim,
                     tile_m=None, out_dtype=jnp.bfloat16):
    """x: (B, T, input_dim) or (B, input_dim).  Returns (-1, num_output_tokens, output_dim)."""
    if x.ndim == 2:
        x = x[:, None, :]                                               # unsqueeze(1)
    B, T, D = x.shape
    M = B * T
    x2 = x.reshape(M, D).astype(jnp.float32)

    mid = prep["w1"].shape[1]
    out_total = meta["out_total"]
    out_pad = meta["out_pad"]
    tile_n = meta["tile_n"]

    vmem_cap = _vmem_capacity_bytes()

    # Row tiling: bigger tiles on 128 MiB parts (v5e/v6e) when there are enough rows.
    if tile_m is None:
        tile_m = 512 if (vmem_cap >= (100 << 20) and M >= 512) else 256
    tile_m = max(16, min(_round_up(tile_m, 16), _round_up(M, 16)))      # 16: bf16 sublane pack
    M_pad = _round_up(M, tile_m)
    if M_pad != M:
        # Zero rows go through LayerNorm as beta-valued (finite) garbage; sliced off below.
        x2 = jnp.pad(x2, ((0, M_pad - M), (0, 0)))

    args = (
        x2,
        prep["ln1_g"], prep["ln1_b"],
        prep["w1"], prep["b1"],
        prep["w2"], prep["b2"],
        prep["ln2_g"], prep["ln2_b"],
        prep["w3"], prep["b3"],
        prep["w4"], prep["b4"],
    )
    resident = args[1:11]          # ln1, w1, b1, w2, b2, ln2, w3, b3 : constant index map

    grid = (M_pad // tile_m, out_pad // tile_n)

    in_specs = [pl.BlockSpec((tile_m, D), lambda i, j: (i, 0))]         # pipelined act tile
    # Constant-index params: single-buffered (DMA'd once, stay VMEM-resident).
    in_specs += [
        pl.BlockSpec(a.shape, lambda i, j: (0, 0), pipeline_mode=pl.Buffered(1))
        for a in resident
    ]
    # fc4 weight/bias slabs streamed along the column axis (default double-buffered).
    in_specs += [
        pl.BlockSpec((mid, tile_n), lambda i, j: (0, j)),
        pl.BlockSpec((1, tile_n), lambda i, j: (0, j)),
    ]
    out_specs = pl.BlockSpec((tile_m, tile_n), lambda i, j: (i, j))

    # Explicit VMEM accounting (no fudge factor).
    nbytes = lambda a: int(a.size) * a.dtype.itemsize
    resident_bytes = sum(nbytes(a) for a in resident)                   # x1 (Buffered(1))
    streamed_bytes = 2 * (mid * tile_n * 2 + tile_n * 4)                # w4/b4 double-buffered
    act_in_bytes = 2 * tile_m * D * 4                                   # x, double-buffered
    act_out_bytes = 2 * tile_m * tile_n * jnp.dtype(out_dtype).itemsize
    scratch_bytes = tile_m * mid * 2                                    # bf16 hidden scratch
    interm_bytes = 4 * tile_m * max(D, mid) * 4                         # live f32 temporaries
    vmem_needed = (resident_bytes + streamed_bytes + act_in_bytes
                   + act_out_bytes + scratch_bytes + interm_bytes)
    vmem_limit = vmem_needed + (8 << 20)                                # Mosaic scratch headroom
    vmem_limit = max(32 << 20, min(vmem_limit, vmem_cap - (8 << 20)))

    flops = 2 * M_pad * (D * mid + 2 * mid * mid + mid * out_pad)
    transcendentals = 2 * M_pad * mid                                   # two GELUs
    bytes_accessed = (sum(nbytes(a) for a in args)
                      + M_pad * out_pad * jnp.dtype(out_dtype).itemsize)

    # TODO(synk): on v7x with a 1-step row grid, sharding the column axis across the
    # two TensorCores (recomputing the hidden per core) would keep both MXUs busy.
    out = pl.pallas_call(
        embedder_kernel,
        out_shape=jax.ShapeDtypeStruct((M_pad, out_pad), out_dtype),
        grid_spec=pltpu.PrefetchScalarGridSpec(
            num_scalar_prefetch=0,
            grid=grid,
            in_specs=in_specs,
            out_specs=out_specs,
            scratch_shapes=[pltpu.VMEM((tile_m, mid), jnp.bfloat16)],
        ),
        compiler_params=pltpu.CompilerParams(
            dimension_semantics=("parallel", "arbitrary"),
            vmem_limit_bytes=int(vmem_limit),
        ),
        cost_estimate=pl.CostEstimate(
            flops=int(flops),
            transcendentals=int(transcendentals),
            bytes_accessed=int(bytes_accessed),
        ),
    )(*args)

    out = out[:M, :out_total]
    return out.reshape(-1, num_output_tokens, output_dim)


def init_params(key, *, input_dim, mid_dim, output_dim, num_output_tokens,
                zero_init_like_torch=False):
    """Deterministic parameter init. Weights stored as (in, out).

    The reference __init__ zeroes fc2/fc3/fc4 weights; set zero_init_like_torch=True
    for that. We default to small random values so the matmul hot path is exercised."""
    out_total = output_dim * num_output_tokens
    ks = jax.random.split(key, 8)
    s = 0.02

    def w(k, shape):
        return jax.random.normal(k, shape, jnp.float32) * s

    return {
        "ln1_g": jnp.ones((input_dim,), jnp.float32),
        "ln1_b": jnp.zeros((input_dim,), jnp.float32),
        "w1": w(ks[0], (input_dim, mid_dim)),
        "b1": w(ks[1], (mid_dim,)),
        "w2": jnp.zeros((mid_dim, mid_dim), jnp.float32) if zero_init_like_torch
              else w(ks[2], (mid_dim, mid_dim)),
        "b2": w(ks[3], (mid_dim,)),
        "ln2_g": jnp.ones((mid_dim,), jnp.float32),
        "ln2_b": jnp.zeros((mid_dim,), jnp.float32),
        "w3": jnp.zeros((mid_dim, mid_dim), jnp.float32) if zero_init_like_torch
              else w(ks[4], (mid_dim, mid_dim)),
        "b3": w(ks[5], (mid_dim,)),
        "w4": jnp.zeros((mid_dim, out_total), jnp.float32) if zero_init_like_torch
              else w(ks[6], (mid_dim, out_total)),
        "b4": w(ks[7], (out_total,)),
    }


def embedder_reference(x, params, *, num_output_tokens, output_dim):
    """Pure-JAX f32 reference mirroring the PyTorch forward exactly."""
    if x.ndim == 2:
        x = x[:, None, :]
    h = _layer_norm(x, params["ln1_g"], params["ln1_b"])
    h = h @ params["w1"] + params["b1"]
    h = _gelu_exact(h)
    h = h @ params["w2"] + params["b2"]
    h = _layer_norm(h, params["ln2_g"], params["ln2_b"])
    h = h @ params["w3"] + params["b3"]
    h = _gelu_exact(h)
    h = h @ params["w4"] + params["b4"]
    return h.reshape(-1, num_output_tokens, output_dim)


if __name__ == "__main__":
    # Small, TPU-friendly sizes consistent with the module's forward.
    # M = B * num_input_tokens = 32 rows, tile_m=16 -> 2 row tiles.
    # out_total = 8 * 40 = 320; tile_n_cap=256 -> tile_n=256, out_pad=512 -> 2 column tiles,
    # exercising the streamed-w4 path, padding, and the pl.when(j==0) scratch reuse.
    B = 4
    num_input_tokens = 8
    input_dim = 128
    mid_dim = 128
    num_output_tokens = 8
    output_dim = 40

    key = jax.random.PRNGKey(0)
    k_x, k_p = jax.random.split(key)

    x = jax.random.normal(k_x, (B, num_input_tokens, input_dim), jnp.float32)
    params = init_params(
        k_p,
        input_dim=input_dim,
        mid_dim=mid_dim,
        output_dim=output_dim,
        num_output_tokens=num_output_tokens,
    )

    # One-time param prep (bf16 cast + fc4 padding), hoisted out of the per-call path.
    prep, meta = prepare_params(
        params,
        num_output_tokens=num_output_tokens,
        output_dim=output_dim,
        tile_n_cap=256,   # small cap so the tiny harness still exercises 2 column steps
    )

    fwd = jax.jit(
        lambda xx: embedder_forward(
            xx, prep, meta,
            num_output_tokens=num_output_tokens,
            output_dim=output_dim,
            tile_m=16,     # small tile so the tiny harness exercises a 2-step row grid
        )
    )
    out = jax.block_until_ready(fwd(x))

    ref = embedder_reference(
        x, params, num_output_tokens=num_output_tokens, output_dim=output_dim
    )

    assert out.shape == (B * num_input_tokens, num_output_tokens, output_dim), out.shape
    out_f32 = out.astype(jnp.float32)
    # Tolerance loosened vs the pure-f32 reference: matmul operands and the kernel
    # output are bf16 (f32 accumulation inside the MXU).
    max_err = float(jnp.max(jnp.abs(out_f32 - ref)))
    assert jnp.allclose(out_f32, ref, rtol=2e-2, atol=2e-2), max_err

    print("KERNEL_OK")
</pallas_src>

<mosaic_0001>
module attributes {stable_mosaic.version = 11 : i64} {
  func.func @embedder_kernel(%arg0: i32, %arg1: i32, %arg2: memref<16x128xf32, #tpu.memory_space<vmem>>, %arg3: memref<1x128xf32, #tpu.memory_space<vmem>>, %arg4: memref<1x128xf32, #tpu.memory_space<vmem>>, %arg5: memref<128x128xbf16, #tpu.memory_space<vmem>>, %arg6: memref<1x128xf32, #tpu.memory_space<vmem>>, %arg7: memref<128x128xbf16, #tpu.memory_space<vmem>>, %arg8: memref<1x128xf32, #tpu.memory_space<vmem>>, %arg9: memref<1x128xf32, #tpu.memory_space<vmem>>, %arg10: memref<1x128xf32, #tpu.memory_space<vmem>>, %arg11: memref<128x128xbf16, #tpu.memory_space<vmem>>, %arg12: memref<1x128xf32, #tpu.memory_space<vmem>>, %arg13: memref<128x256xbf16, #tpu.memory_space<vmem>>, %arg14: memref<1x256xf32, #tpu.memory_space<vmem>>, %arg15: memref<16x256xbf16, #tpu.memory_space<vmem>>, %arg16: memref<16x128xbf16, #tpu.memory_space<vmem>>) attributes {dimension_semantics = [#tpu.dimension_semantics<parallel>, #tpu.dimension_semantics<arbitrary>], iteration_bounds = array<i64: 2, 2>, scalar_prefetch = 0 : i64, scratch_operands = 1 : i64, tpu.core_type = #tpu.core_type<tc>, window_params = [{transform_indices = @transform_0, window_bounds = array<i64: 16, 128>}, {pipeline_mode = #tpu.pipeline_mode<synchronous>, transform_indices = @transform_1, window_bounds = array<i64: 1, 128>}, {pipeline_mode = #tpu.pipeline_mode<synchronous>, transform_indices = @transform_2, window_bounds = array<i64: 1, 128>}, {pipeline_mode = #tpu.pipeline_mode<synchronous>, transform_indices = @transform_3, window_bounds = array<i64: 128, 128>}, {pipeline_mode = #tpu.pipeline_mode<synchronous>, transform_indices = @transform_4, window_bounds = array<i64: 1, 128>}, {pipeline_mode = #tpu.pipeline_mode<synchronous>, transform_indices = @transform_5, window_bounds = array<i64: 128, 128>}, {pipeline_mode = #tpu.pipeline_mode<synchronous>, transform_indices = @transform_6, window_bounds = array<i64: 1, 128>}, {pipeline_mode = #tpu.pipeline_mode<synchronous>, transform_indices = @transform_7, window_bounds = array<i64: 1, 128>}, {pipeline_mode = #tpu.pipeline_mode<synchronous>, transform_indices = @transform_8, window_bounds = array<i64: 1, 128>}, {pipeline_mode = #tpu.pipeline_mode<synchronous>, transform_indices = @transform_9, window_bounds = array<i64: 128, 128>}, {pipeline_mode = #tpu.pipeline_mode<synchronous>, transform_indices = @transform_10, window_bounds = array<i64: 1, 128>}, {transform_indices = @transform_11, window_bounds = array<i64: 128, 256>}, {transform_indices = @transform_12, window_bounds = array<i64: 1, 256>}, {transform_indices = @transform_13, window_bounds = array<i64: 16, 256>}]} {
    %c0_i32 = arith.constant 0 : i32
    %0 = arith.cmpi eq, %arg1, %c0_i32 : i32
    %1 = arith.extui %0 : i1 to i32
    %c0_i32_0 = arith.constant 0 : i32
    %2 = arith.cmpi ne, %1, %c0_i32_0 : i32
    scf.if %2 {
      %c0_8 = arith.constant 0 : index
      %c0_9 = arith.constant 0 : index
      %11 = vector.load %arg2[%c0_8, %c0_9] : memref<16x128xf32, #tpu.memory_space<vmem>>, vector<16x128xf32>
      %c0_10 = arith.constant 0 : index
      %c0_11 = arith.constant 0 : index
      %12 = vector.load %arg3[%c0_10, %c0_11] : memref<1x128xf32, #tpu.memory_space<vmem>>, vector<1x128xf32>
      %c0_12 = arith.constant 0 : index
      %c0_13 = arith.constant 0 : index
      %13 = vector.load %arg4[%c0_12, %c0_13] : memref<1x128xf32, #tpu.memory_space<vmem>>, vector<1x128xf32>
      %cst_14 = arith.constant dense<0.000000e+00> : vector<16xf32>
      %14 = vector.multi_reduction <add>, %11, %cst_14 [1] : vector<16x128xf32> to vector<16xf32>
      %15 = vector.shape_cast %14 : vector<16xf32> to vector<16x1xf32>
      %cst_15 = arith.constant 1.280000e+02 : f32
      %16 = vector.broadcast %cst_15 : f32 to vector<16x1xf32>
      %17 = arith.divf %15, %16 : vector<16x1xf32>
      %18 = vector.broadcast %17 : vector<16x1xf32> to vector<16x128xf32>
      %19 = arith.subf %11, %18 : vector<16x128xf32>
      %20 = arith.mulf %19, %19 : vector<16x128xf32>
      %cst_16 = arith.constant dense<0.000000e+00> : vector<16xf32>
      %21 = vector.multi_reduction <add>, %20, %cst_16 [1] : vector<16x128xf32> to vector<16xf32>
      %22 = vector.shape_cast %21 : vector<16xf32> to vector<16x1xf32>
      %cst_17 = arith.constant 1.280000e+02 : f32
      %23 = vector.broadcast %cst_17 : f32 to vector<16x1xf32>
      %24 = arith.divf %22, %23 : vector<16x1xf32>
      %cst_18 = arith.constant 9.99999974E-6 : f32
      %25 = vector.broadcast %cst_18 : f32 to vector<16x1xf32>
      %26 = arith.addf %24, %25 : vector<16x1xf32>
      %27 = math.rsqrt %26 : vector<16x1xf32>
      %28 = vector.broadcast %27 : vector<16x1xf32> to vector<16x128xf32>
      %29 = arith.mulf %19, %28 : vector<16x128xf32>
      %30 = vector.broadcast %12 : vector<1x128xf32> to vector<16x128xf32>
      %31 = arith.mulf %29, %30 : vector<16x128xf32>
      %32 = vector.broadcast %13 : vector<1x128xf32> to vector<16x128xf32>
      %33 = arith.addf %31, %32 : vector<16x128xf32>
      %34 = arith.truncf %33 : vector<16x128xf32> to vector<16x128xbf16>
      %c0_19 = arith.constant 0 : index
      %c0_20 = arith.constant 0 : index
      %35 = vector.load %arg5[%c0_19, %c0_20] : memref<128x128xbf16, #tpu.memory_space<vmem>>, vector<128x128xbf16>
      %cst_21 = arith.constant dense<0.000000e+00> : vector<16x128xf32>
      %36 = tpu.matmul %34, %35, %cst_21 {dimension_numbers = #tpu.dot_dimension_numbers<[1], [0], [0], [1], [0, 0, 1, 1], [], []>} : vector<16x128xbf16>, vector<128x128xbf16>, vector<16x128xf32> -> vector<16x128xf32>
      %c0_22 = arith.constant 0 : index
      %c0_23 = arith.constant 0 : index
      %37 = vector.load %arg6[%c0_22, %c0_23] : memref<1x128xf32, #tpu.memory_space<vmem>>, vector<1x128xf32>
      %38 = vector.broadcast %37 : vector<1x128xf32> to vector<16x128xf32>
      %39 = arith.addf %36, %38 : vector<16x128xf32>
      %cst_24 = arith.constant 5.000000e-01 : f32
      %40 = vector.broadcast %cst_24 : f32 to vector<16x128xf32>
      %41 = arith.mulf %40, %39 : vector<16x128xf32>
      %cst_25 = arith.constant 0.707106769 : f32
      %42 = vector.broadcast %cst_25 : f32 to vector<16x128xf32>
      %43 = arith.mulf %39, %42 : vector<16x128xf32>
      %44 = math.erf %43 : vector<16x128xf32>
      %cst_26 = arith.constant 1.000000e+00 : f32
      %45 = vector.broadcast %cst_26 : f32 to vector<16x128xf32>
      %46 = arith.addf %45, %44 : vector<16x128xf32>
      %47 = arith.mulf %41, %46 : vector<16x128xf32>
      %48 = arith.truncf %47 : vector<16x128xf32> to vector<16x128xbf16>
      %c0_27 = arith.constant 0 : index
      %c0_28 = arith.constant 0 : index
      %49 = vector.load %arg7[%c0_27, %c0_28] : memref<128x128xbf16, #tpu.memory_space<vmem>>, vector<128x128xbf16>
      %cst_29 = arith.constant dense<0.000000e+00> : vector<16x128xf32>
      %50 = tpu.matmul %48, %49, %cst_29 {dimension_numbers = #tpu.dot_dimension_numbers<[1], [0], [0], [1], [0, 0, 1, 1], [], []>} : vector<16x128xbf16>, vector<128x128xbf16>, vector<16x128xf32> -> vector<16x128xf32>
      %c0_30 = arith.constant 0 : index
      %c0_31 = arith.constant 0 : index
      %51 = vector.load %arg8[%c0_30, %c0_31] : memref<1x128xf32, #tpu.memory_space<vmem>>, vector<1x128xf32>
      %52 = vector.broadcast %51 : vector<1x128xf32> to vector<16x128xf32>
      %53 = arith.addf %50, %52 : vector<16x128xf32>
      %c0_32 = arith.constant 0 : index
      %c0_33 = arith.constant 0 : index
      %54 = vector.load %arg9[%c0_32, %c0_33] : memref<1x128xf32, #tpu.memory_space<vmem>>, vector<1x128xf32>
      %c0_34 = arith.constant 0 : index
      %c0_35 = arith.constant 0 : index
      %55 = vector.load %arg10[%c0_34, %c0_35] : memref<1x128xf32, #tpu.memory_space<vmem>>, vector<1x128xf32>
      %cst_36 = arith.constant dense<0.000000e+00> : vector<16xf32>
      %56 = vector.multi_reduction <add>, %53, %cst_36 [1] : vector<16x128xf32> to vector<16xf32>
      %57 = vector.shape_cast %56 : vector<16xf32> to vector<16x1xf32>
      %cst_37 = arith.constant 1.280000e+02 : f32
      %58 = vector.broadcast %cst_37 : f32 to vector<16x1xf32>
      %59 = arith.divf %57, %58 : vector<16x1xf32>
      %60 = vector.broadcast %59 : vector<16x1xf32> to vector<16x128xf32>
      %61 = arith.subf %53, %60 : vector<16x128xf32>
      %62 = arith.mulf %61, %61 : vector<16x128xf32>
      %cst_38 = arith.constant dense<0.000000e+00> : vector<16xf32>
      %63 = vector.multi_reduction <add>, %62, %cst_38 [1] : vector<16x128xf32> to vector<16xf32>
      %64 = vector.shape_cast %63 : vector<16xf32> to vector<16x1xf32>
      %cst_39 = arith.constant 1.280000e+02 : f32
      %65 = vector.broadcast %cst_39 : f32 to vector<16x1xf32>
      %66 = arith.divf %64, %65 : vector<16x1xf32>
      %cst_40 = arith.constant 9.99999974E-6 : f32
      %67 = vector.broadcast %cst_40 : f32 to vector<16x1xf32>
      %68 = arith.addf %66, %67 : vector<16x1xf32>
      %69 = math.rsqrt %68 : vector<16x1xf32>
      %70 = vector.broadcast %69 : vector<16x1xf32> to vector<16x128xf32>
      %71 = arith.mulf %61, %70 : vector<16x128xf32>
      %72 = vector.broadcast %54 : vector<1x128xf32> to vector<16x128xf32>
      %73 = arith.mulf %71, %72 : vector<16x128xf32>
      %74 = vector.broadcast %55 : vector<1x128xf32> to vector<16x128xf32>
      %75 = arith.addf %73, %74 : vector<16x128xf32>
      %76 = arith.truncf %75 : vector<16x128xf32> to vector<16x128xbf16>
      %c0_41 = arith.constant 0 : index
      %c0_42 = arith.constant 0 : index
      %77 = vector.load %arg11[%c0_41, %c0_42] : memref<128x128xbf16, #tpu.memory_space<vmem>>, vector<128x128xbf16>
      %cst_43 = arith.constant dense<0.000000e+00> : vector<16x128xf32>
      %78 = tpu.matmul %76, %77, %cst_43 {dimension_numbers = #tpu.dot_dimension_numbers<[1], [0], [0], [1], [0, 0, 1, 1], [], []>} : vector<16x128xbf16>, vector<128x128xbf16>, vector<16x128xf32> -> vector<16x128xf32>
      %c0_44 = arith.constant 0 : index
      %c0_45 = arith.constant 0 : index
      %79 = vector.load %arg12[%c0_44, %c0_45] : memref<1x128xf32, #tpu.memory_space<vmem>>, vector<1x128xf32>
      %80 = vector.broadcast %79 : vector<1x128xf32> to vector<16x128xf32>
      %81 = arith.addf %78, %80 : vector<16x128xf32>
      %cst_46 = arith.constant 5.000000e-01 : f32
      %82 = vector.broadcast %cst_46 : f32 to vector<16x128xf32>
      %83 = arith.mulf %82, %81 : vector<16x128xf32>
      %cst_47 = arith.constant 0.707106769 : f32
      %84 = vector.broadcast %cst_47 : f32 to vector<16x128xf32>
      %85 = arith.mulf %81, %84 : vector<16x128xf32>
      %86 = math.erf %85 : vector<16x128xf32>
      %cst_48 = arith.constant 1.000000e+00 : f32
      %87 = vector.broadcast %cst_48 : f32 to vector<16x128xf32>
      %88 = arith.addf %87, %86 : vector<16x128xf32>
      %89 = arith.mulf %83, %88 : vector<16x128xf32>
      %90 = arith.truncf %89 : vector<16x128xf32> to vector<16x128xbf16>
      %c0_49 = arith.constant 0 : index
      %c0_50 = arith.constant 0 : index
      %91 = vector.load %arg16[%c0_49, %c0_50] : memref<16x128xbf16, #tpu.memory_space<vmem>>, vector<16x128xbf16>
      tpu.vector_store %arg16[%c0_49, %c0_50], %90 {strides = array<i32>} : memref<16x128xbf16, #tpu.memory_space<vmem>>, vector<16x128xbf16>,
    } else {
    }
    %c0 = arith.constant 0 : index
    %c0_1 = arith.constant 0 : index
    %3 = vector.load %arg16[%c0, %c0_1] : memref<16x128xbf16, #tpu.memory_space<vmem>>, vector<16x128xbf16>
    %c0_2 = arith.constant 0 : index
    %c0_3 = arith.constant 0 : index
    %4 = vector.load %arg13[%c0_2, %c0_3] : memref<128x256xbf16, #tpu.memory_space<vmem>>, vector<128x256xbf16>
    %cst = arith.constant dense<0.000000e+00> : vector<16x256xf32>
    %5 = tpu.matmul %3, %4, %cst {dimension_numbers = #tpu.dot_dimension_numbers<[1], [0], [0], [1], [0, 0, 1, 1], [], []>} : vector<16x128xbf16>, vector<128x256xbf16>, vector<16x256xf32> -> vector<16x256xf32>
    %c0_4 = arith.constant 0 : index
    %c0_5 = arith.constant 0 : index
    %6 = vector.load %arg14[%c0_4, %c0_5] : memref<1x256xf32, #tpu.memory_space<vmem>>, vector<1x256xf32>
    %7 = vector.broadcast %6 : vector<1x256xf32> to vector<16x256xf32>
    %8 = arith.addf %5, %7 : vector<16x256xf32>
    %9 = arith.truncf %8 : vector<16x256xf32> to vector<16x256xbf16>
    %c0_6 = arith.constant 0 : index
    %c0_7 = arith.constant 0 : index
    %10 = vector.load %arg15[%c0_6, %c0_7] : memref<16x256xbf16, #tpu.memory_space<vmem>>, vector<16x256xbf16>
    tpu.vector_store %arg15[%c0_6, %c0_7], %9 {strides = array<i32>} : memref<16x256xbf16, #tpu.memory_space<vmem>>, vector<16x256xbf16>,
    return
  }
  func.func @transform_0(%arg0: i32, %arg1: i32) -> (i32, i32) {
    %c0_i32 = arith.constant 0 : i32
    %c0_i32_0 = arith.constant 0 : i32
    return %arg0, %c0_i32 : i32, i32
  }
  func.func @transform_1(%arg0: i32, %arg1: i32) -> (i32, i32) {
    %c0_i32 = arith.constant 0 : i32
    %c0_i32_0 = arith.constant 0 : i32
    %c0_i32_1 = arith.constant 0 : i32
    return %c0_i32, %c0_i32_0 : i32, i32
  }
  func.func @transform_2(%arg0: i32, %arg1: i32) -> (i32, i32) {
    %c0_i32 = arith.constant 0 : i32
    %c0_i32_0 = arith.constant 0 : i32
    %c0_i32_1 = arith.constant 0 : i32
    return %c0_i32, %c0_i32_0 : i32, i32
  }
  func.func @transform_3(%arg0: i32, %arg1: i32) -> (i32, i32) {
    %c0_i32 = arith.constant 0 : i32
    %c0_i32_0 = arith.constant 0 : i32
    %c0_i32_1 = arith.constant 0 : i32
    return %c0_i32, %c0_i32_0 : i32, i32
  }
  func.func @transform_4(%arg0: i32, %arg1: i32) -> (i32, i32) {
    %c0_i32 = arith.constant 0 : i32
    %c0_i32_0 = arith.constant 0 : i32
    %c0_i32_1 = arith.constant 0 : i32
    return %c0_i32, %c0_i32_0 : i32, i32
  }
  func.func @transform_5(%arg0: i32, %arg1: i32) -> (i32, i32) {
    %c0_i32 = arith.constant 0 : i32
    %c0_i32_0 = arith.constant 0 : i32
    %c0_i32_1 = arith.constant 0 : i32
    return %c0_i32, %c0_i32_0 : i32, i32
  }
  func.func @transform_6(%arg0: i32, %arg1: i32) -> (i32, i32) {
    %c0_i32 = arith.constant 0 : i32
    %c0_i32_0 = arith.constant 0 : i32
    %c0_i32_1 = arith.constant 0 : i32
    return %c0_i32, %c0_i32_0 : i32, i32
  }
  func.func @transform_7(%arg0: i32, %arg1: i32) -> (i32, i32) {
    %c0_i32 = arith.constant 0 : i32
    %c0_i32_0 = arith.constant 0 : i32
    %c0_i32_1 = arith.constant 0 : i32
    return %c0_i32, %c0_i32_0 : i32, i32
  }
  func.func @transform_8(%arg0: i32, %arg1: i32) -> (i32, i32) {
    %c0_i32 = arith.constant 0 : i32
    %c0_i32_0 = arith.constant 0 : i32
    %c0_i32_1 = arith.constant 0 : i32
    return %c0_i32, %c0_i32_0 : i32, i32
  }
  func.func @transform_9(%arg0: i32, %arg1: i32) -> (i32, i32) {
    %c0_i32 = arith.constant 0 : i32
    %c0_i32_0 = arith.constant 0 : i32
    %c0_i32_1 = arith.constant 0 : i32
    return %c0_i32, %c0_i32_0 : i32, i32
  }
  func.func @transform_10(%arg0: i32, %arg1: i32) -> (i32, i32) {
    %c0_i32 = arith.constant 0 : i32
    %c0_i32_0 = arith.constant 0 : i32
    %c0_i32_1 = arith.constant 0 : i32
    return %c0_i32, %c0_i32_0 : i32, i32
  }
  func.func @transform_11(%arg0: i32, %arg1: i32) -> (i32, i32) {
    %c0_i32 = arith.constant 0 : i32
    %c0_i32_0 = arith.constant 0 : i32
    return %c0_i32, %arg1 : i32, i32
  }
  func.func @transform_12(%arg0: i32, %arg1: i32) -> (i32, i32) {
    %c0_i32 = arith.constant 0 : i32
    %c0_i32_0 = arith.constant 0 : i32
    return %c0_i32, %arg1 : i32, i32
  }
  func.func @transform_13(%arg0: i32, %arg1: i32) -> (i32, i32) {
    %c0_i32 = arith.constant 0 : i32
    return %arg0, %arg1 : i32, i32
  }
}

</mosaic_0001>

<llo_original>
// kernel: _lambda_.1
$region0: #{_lambda_.1}
  #allocation0 [shape = 'u32[]', space=smem, size = 0x4, offset = 0x4, fixed_abs, tag = 'smem constant byte address 0x4 - core index']
  #allocation1 [shape = 'u32[144,128]{1,0:T(1,128)}', space=vmem, size = 0x12000, scoped, tag = 'internal scratch']
  #allocation2 [shape = 'bf16[16,128]{1,0:T(8,128)(2,1)}', space=vmem, size = 0x1000, scoped, tag = 'scratch operand']
  %s0 = inlined_call_operand.hbm [shape: f32[32,128], index: 0, kind: input, shape index: {}]
  %s1 = inlined_call_operand.vmem [shape: f32[1,128], index: 1, kind: input, shape index: {}, may-alias: {1,7}]
  %s2 = inlined_call_operand.vmem [shape: f32[1,128], index: 2, kind: input, shape index: {}, may-alias: {2,8}]
  %s3 = inlined_call_operand.hbm [shape: bf16[128,128], index: 3, kind: input, shape index: {}]
  %s4 = inlined_call_operand.vmem [shape: f32[1,128], index: 4, kind: input, shape index: {}]
  %s5 = inlined_call_operand.hbm [shape: bf16[128,128], index: 5, kind: input, shape index: {}]
  %s6 = inlined_call_operand.vmem [shape: f32[1,128], index: 6, kind: input, shape index: {}]
  %s7 = inlined_call_operand.vmem [shape: f32[1,128], index: 7, kind: input, shape index: {}, may-alias: {1,7}]
  %s8 = inlined_call_operand.vmem [shape: f32[1,128], index: 8, kind: input, shape index: {}, may-alias: {2,8}]
  %s9 = inlined_call_operand.hbm [shape: bf16[128,128], index: 9, kind: input, shape index: {}]
  %s10 = inlined_call_operand.vmem [shape: f32[1,128], index: 10, kind: input, shape index: {}]
  %s11 = inlined_call_operand.hbm [shape: bf16[128,512], index: 11, kind: input, shape index: {}]
  %s12 = inlined_call_operand.vmem [shape: f32[1,512], index: 12, kind: input, shape index: {}]
  %s13 = inlined_call_operand.vmem [shape: bf16[32,512], index: 13, kind: output, shape index: {}]
  %s14 = sld [smem:[#allocation0]]
  $region143: #{_lambda_.1} parent=0
    _
  %s16 = ssub.s32 1, %s14
  %s17 = scalar_select 0, %s16, %s14
  $region1: #{_lambda_.1} parent=0
    #allocation3 [shape = 'u8[16384]{0}', space=vmem, size = 0x4000, scoped, tag = 'input window, operand 0']
    #allocation4 [shape = 's32[2]{0}', space=sflag, size = 0x8, scoped, tag = 'scoped memory for _lambda_.1']
    #allocation5 [shape = 'u8[32768]{0}', space=vmem, size = 0x8000, scoped, tag = 'input window, operand 3, single buffered']
    #allocation6 [shape = 's32[1]{0}', space=sflag, size = 0x4, scoped, tag = 'scoped memory for _lambda_.1']
    #allocation7 [shape = 'u8[32768]{0}', space=vmem, size = 0x8000, scoped, tag = 'input window, operand 5, single buffered']
    #allocation8 [shape = 'u8[32768]{0}', space=vmem, size = 0x8000, scoped, tag = 'input window, operand 9, single buffered']
    #allocation9 [shape = 's32[1]{0}', space=sflag, size = 0x4, scoped, tag = 'scoped memory for _lambda_.1']
    #allocation10 [shape = 'u8[131072]{0}', space=vmem, size = 0x20000, scoped, tag = 'input window, operand 11']
    #allocation11 [shape = 'u8[16384]{0}', space=vmem, size = 0x4000, scoped, tag = 'output window, operand 0']
    %18 = vsyncpa [#allocation4], 0
    %s19 = scalar_lea.sflag [#allocation4], 1
    %20 = vsyncpa %s19, 0
    %21 = vsyncpa [#allocation6], 0
    %22 = vsyncpa [#allocation9], 0
    loop: start=0, step=1, limit=6
    $region2: #{_lambda_.1} parent=1 // loop_pre_header
      _
    $region3: #{_lambda_.1} parent=1 // loop_header
      %s24 = sphi 0, %s28
      %p25 = scmp.ge.s32.totalorder %s24, 6
      %s31 = sphi 0, %s43
      %s32 = sphi 0, %s39
      %s33 = sphi 0, %s31
      %s34 = sphi 0, %s32
      %s35 = sphi 0, %s33
      %s36 = sphi 0, %s34
      %s46 = sphi 0, %s48
      %s49 = sphi 0, %s46
      %s50 = sphi 0, %s49
      %s66 = sphi 0, %s50
      %s70 = sphi 0, %s70
      %s72 = sphi 0, %s70
      %s73 = sphi 0, %s72
      %s87 = sphi 0, %s73
      %s91 = sphi 0, %s91
      %s93 = sphi 0, %s91
      %s94 = sphi 0, %s93
      %s108 = sphi 0, %s94
      %s112 = sphi 0, %s112
      %s114 = sphi 0, %s112
      %s115 = sphi 0, %s114
      %s129 = sphi 0, %s115
      %s133 = sphi 0, %s133
      %s135 = sphi 0, %s133
      %s136 = sphi 0, %s135
      %s150 = sphi 0, %s136
      %s154 = sphi 0, %s154
      %s156 = sphi 0, %s154
      %s157 = sphi 0, %s156
      %s171 = sphi 0, %s157
      %s175 = sphi 0, %s175
      %s177 = sphi 0, %s175
      %s178 = sphi 0, %s177
      %s192 = sphi 0, %s178
      %s196 = sphi 0, %s196
      %s198 = sphi 0, %s196
      %s199 = sphi 0, %s198
      %s213 = sphi 0, %s199
      %s217 = sphi 0, %s217
      %s219 = sphi 0, %s217
      %s220 = sphi 0, %s219
      %s234 = sphi 0, %s220
      %s238 = sphi 0, %s238
      %s240 = sphi 0, %s238
      %s241 = sphi 0, %s240
      %s255 = sphi 0, %s241
      %s259 = sphi 0, %s259
      %s261 = sphi 0, %s259
      %s262 = sphi 0, %s261
      %s276 = sphi 0, %s262
      %s282 = sphi 0, %s284
      %s285 = sphi 0, %s282
      %s286 = sphi 0, %s285
      %s302 = sphi 0, %s286
      %s308 = sphi 0, %s310
      %s311 = sphi 0, %s308
      %s312 = sphi 0, %s311
      %s328 = sphi 0, %s312
      %s336 = sphi 0, %s338
      %s339 = sphi 0, %s336
      %s340 = sphi 0, %s339
      %s356 = sphi 0, %s340
    $region4: #{_lambda_.1} parent=1 // loop_header_branch
      %27 = sbr.rel (%p25) target = $region8
    $region5: #{_lambda_.1} parent=1 // loop_body
      %s29 = ssub.s32 %s24, 1
      %s30 = ssub.s32 %s24, 2
      %s37 = sadd.s32 1, %s32
      %p38 = scmp.ge.s32.totalorder %s37, 2
      %s39 = scalar_select %p38, 0, %s37
      %s40 = sadd.s32 1, %s31
      %s41 = scalar_select %p38, %s40, %s31
      %p42 = scmp.ge.s32.totalorder %s41, 2
      %s43 = scalar_select %p42, 0, %s41
      %s44 = ssub.s32 %s31, %s43
      %p45 = scmp.eq.s32.totalorder %s44, 0
      %s47 = sadd.s32 %s46, 1
      %s48 = scalar_select %p45, %s46, %s47
      %p51 = pneg %p45
      %p52 = scmp.eq.s32.totalorder %s24, 3
      %p53 = por %p51, %p52
      %p54 = scmp.ne.s32.totalorder %s46, %s49
      %p55 = scmp.eq.s32.totalorder %s24, 0
      %p56 = por %p54, %p55
      %p57 = scmp.ne.s32.totalorder %s46, %s49
      %p58 = scmp.eq.s32.totalorder %s29, 3
      %p59 = por %p57, %p58
      %p60 = scmp.ne.s32.totalorder %s49, %s50
      %p61 = scmp.eq.s32.totalorder %s29, 0
      %p62 = por %p60, %p61
      %p63 = scmp.ne.s32.totalorder %s49, %s50
      %p64 = scmp.eq.s32.totalorder %s30, 3
      %p65 = por %p63, %p64
      %p67 = scmp.ne.s32.totalorder %s50, %s66
      %p68 = scmp.eq.s32.totalorder %s30, 0
      %p69 = por %p67, %p68
      %s71 = sadd.s32 %s70, 1
      %p74 = scmp.eq.s32.totalorder %s24, 3
      %p75 = scmp.ne.s32.totalorder %s70, %s72
      %p76 = scmp.eq.s32.totalorder %s24, 0
      %p77 = por %p75, %p76
      %p78 = scmp.ne.s32.totalorder %s70, %s72
      %p79 = scmp.eq.s32.totalorder %s29, 3
      %p80 = por %p78, %p79
      %p81 = scmp.ne.s32.totalorder %s72, %s73
      %p82 = scmp.eq.s32.totalorder %s29, 0
      %p83 = por %p81, %p82
      %p84 = scmp.ne.s32.totalorder %s72, %s73
      %p85 = scmp.eq.s32.totalorder %s30, 3
      %p86 = por %p84, %p85
      %p88 = scmp.ne.s32.totalorder %s73, %s87
      %p89 = scmp.eq.s32.totalorder %s30, 0
      %p90 = por %p88, %p89
      %s92 = sadd.s32 %s91, 1
      %p95 = scmp.eq.s32.totalorder %s24, 3
      %p96 = scmp.ne.s32.totalorder %s91, %s93
      %p97 = scmp.eq.s32.totalorder %s24, 0
      %p98 = por %p96, %p97
      %p99 = scmp.ne.s32.totalorder %s91, %s93
      %p100 = scmp.eq.s32.totalorder %s29, 3
      %p101 = por %p99, %p100
      %p102 = scmp.ne.s32.totalorder %s93, %s94
      %p103 = scmp.eq.s32.totalorder %s29, 0
      %p104 = por %p102, %p103
      %p105 = scmp.ne.s32.totalorder %s93, %s94
      %p106 = scmp.eq.s32.totalorder %s30, 3
      %p107 = por %p105, %p106
      %p109 = scmp.ne.s32.totalorder %s94, %s108
      %p110 = scmp.eq.s32.totalorder %s30, 0
      %p111 = por %p109, %p110
      %s113 = sadd.s32 %s112, 1
      %p116 = scmp.eq.s32.totalorder %s24, 3
      %p117 = scmp.ne.s32.totalorder %s112, %s114
      %p118 = scmp.eq.s32.totalorder %s24, 0
      %p119 = por %p117, %p118
      %p120 = scmp.ne.s32.totalorder %s112, %s114
      %p121 = scmp.eq.s32.totalorder %s29, 3
      %p122 = por %p120, %p121
      %p123 = scmp.ne.s32.totalorder %s114, %s115
      %p124 = scmp.eq.s32.totalorder %s29, 0
      %p125 = por %p123, %p124
      %p126 = scmp.ne.s32.totalorder %s114, %s115
      %p127 = scmp.eq.s32.totalorder %s30, 3
      %p128 = por %p126, %p127
      %p130 = scmp.ne.s32.totalorder %s115, %s129
      %p131 = scmp.eq.s32.totalorder %s30, 0
      %p132 = por %p130, %p131
      %s134 = sadd.s32 %s133, 1
      %p137 = scmp.eq.s32.totalorder %s24, 3
      %p138 = scmp.ne.s32.totalorder %s133, %s135
      %p139 = scmp.eq.s32.totalorder %s24, 0
      %p140 = por %p138, %p139
      %p141 = scmp.ne.s32.totalorder %s133, %s135
      %p142 = scmp.eq.s32.totalorder %s29, 3
      %p143 = por %p141, %p142
      %p144 = scmp.ne.s32.totalorder %s135, %s136
      %p145 = scmp.eq.s32.totalorder %s29, 0
      %p146 = por %p144, %p145
      %p147 = scmp.ne.s32.totalorder %s135, %s136
      %p148 = scmp.eq.s32.totalorder %s30, 3
      %p149 = por %p147, %p148
      %p151 = scmp.ne.s32.totalorder %s136, %s150
      %p152 = scmp.eq.s32.totalorder %s30, 0
      %p153 = por %p151, %p152
      %s155 = sadd.s32 %s154, 1
      %p158 = scmp.eq.s32.totalorder %s24, 3
      %p159 = scmp.ne.s32.totalorder %s154, %s156
      %p160 = scmp.eq.s32.totalorder %s24, 0
      %p161 = por %p159, %p160
      %p162 = scmp.ne.s32.totalorder %s154, %s156
      %p163 = scmp.eq.s32.totalorder %s29, 3
      %p164 = por %p162, %p163
      %p165 = scmp.ne.s32.totalorder %s156, %s157
      %p166 = scmp.eq.s32.totalorder %s29, 0
      %p167 = por %p165, %p166
      %p168 = scmp.ne.s32.totalorder %s156, %s157
      %p169 = scmp.eq.s32.totalorder %s30, 3
      %p170 = por %p168, %p169
      %p172 = scmp.ne.s32.totalorder %s157, %s171
      %p173 = scmp.eq.s32.totalorder %s30, 0
      %p174 = por %p172, %p173
      %s176 = sadd.s32 %s175, 1
      %p179 = scmp.eq.s32.totalorder %s24, 3
      %p180 = scmp.ne.s32.totalorder %s175, %s177
      %p181 = scmp.eq.s32.totalorder %s24, 0
      %p182 = por %p180, %p181
      %p183 = scmp.ne.s32.totalorder %s175, %s177
      %p184 = scmp.eq.s32.totalorder %s29, 3
      %p185 = por %p183, %p184
      %p186 = scmp.ne.s32.totalorder %s177, %s178
      %p187 = scmp.eq.s32.totalorder %s29, 0
      %p188 = por %p186, %p187
      %p189 = scmp.ne.s32.totalorder %s177, %s178
      %p190 = scmp.eq.s32.totalorder %s30, 3
      %p191 = por %p189, %p190
      %p193 = scmp.ne.s32.totalorder %s178, %s192
      %p194 = scmp.eq.s32.totalorder %s30, 0
      %p195 = por %p193, %p194
      %s197 = sadd.s32 %s196, 1
      %p200 = scmp.eq.s32.totalorder %s24, 3
      %p201 = scmp.ne.s32.totalorder %s196, %s198
      %p202 = scmp.eq.s32.totalorder %s24, 0
      %p203 = por %p201, %p202
      %p204 = scmp.ne.s32.totalorder %s196, %s198
      %p205 = scmp.eq.s32.totalorder %s29, 3
      %p206 = por %p204, %p205
      %p207 = scmp.ne.s32.totalorder %s198, %s199
      %p208 = scmp.eq.s32.totalorder %s29, 0
      %p209 = por %p207, %p208
      %p210 = scmp.ne.s32.totalorder %s198, %s199
      %p211 = scmp.eq.s32.totalorder %s30, 3
      %p212 = por %p210, %p211
      %p214 = scmp.ne.s32.totalorder %s199, %s213
      %p215 = scmp.eq.s32.totalorder %s30, 0
      %p216 = por %p214, %p215
      %s218 = sadd.s32 %s217, 1
      %p221 = scmp.eq.s32.totalorder %s24, 3
      %p222 = scmp.ne.s32.totalorder %s217, %s219
      %p223 = scmp.eq.s32.totalorder %s24, 0
      %p224 = por %p222, %p223
      %p225 = scmp.ne.s32.totalorder %s217, %s219
      %p226 = scmp.eq.s32.totalorder %s29, 3
      %p227 = por %p225, %p226
      %p228 = scmp.ne.s32.totalorder %s219, %s220
      %p229 = scmp.eq.s32.totalorder %s29, 0
      %p230 = por %p228, %p229
      %p231 = scmp.ne.s32.totalorder %s219, %s220
      %p232 = scmp.eq.s32.totalorder %s30, 3
      %p233 = por %p231, %p232
      %p235 = scmp.ne.s32.totalorder %s220, %s234
      %p236 = scmp.eq.s32.totalorder %s30, 0
      %p237 = por %p235, %p236
      %s239 = sadd.s32 %s238, 1
      %p242 = scmp.eq.s32.totalorder %s24, 3
      %p243 = scmp.ne.s32.totalorder %s238, %s240
      %p244 = scmp.eq.s32.totalorder %s24, 0
      %p245 = por %p243, %p244
      %p246 = scmp.ne.s32.totalorder %s238, %s240
      %p247 = scmp.eq.s32.totalorder %s29, 3
      %p248 = por %p246, %p247
      %p249 = scmp.ne.s32.totalorder %s240, %s241
      %p250 = scmp.eq.s32.totalorder %s29, 0
      %p251 = por %p249, %p250
      %p252 = scmp.ne.s32.totalorder %s240, %s241
      %p253 = scmp.eq.s32.totalorder %s30, 3
      %p254 = por %p252, %p253
      %p256 = scmp.ne.s32.totalorder %s241, %s255
      %p257 = scmp.eq.s32.totalorder %s30, 0
      %p258 = por %p256, %p257
      %s260 = sadd.s32 %s259, 1
      %p263 = scmp.eq.s32.totalorder %s24, 3
      %p264 = scmp.ne.s32.totalorder %s259, %s261
      %p265 = scmp.eq.s32.totalorder %s24, 0
      %p266 = por %p264, %p265
      %p267 = scmp.ne.s32.totalorder %s259, %s261
      %p268 = scmp.eq.s32.totalorder %s29, 3
      %p269 = por %p267, %p268
      %p270 = scmp.ne.s32.totalorder %s261, %s262
      %p271 = scmp.eq.s32.totalorder %s29, 0
      %p272 = por %p270, %p271
      %p273 = scmp.ne.s32.totalorder %s261, %s262
      %p274 = scmp.eq.s32.totalorder %s30, 3
      %p275 = por %p273, %p274
      %p277 = scmp.ne.s32.totalorder %s262, %s276
      %p278 = scmp.eq.s32.totalorder %s30, 0
      %p279 = por %p277, %p278
      %s280 = ssub.s32 %s32, %s39
      %p281 = scmp.eq.s32.totalorder %s280, 0
      %s283 = sadd.s32 %s282, 1
      %s284 = scalar_select %p281, %s282, %s283
      %p287 = pneg %p281
      %p288 = scmp.eq.s32.totalorder %s24, 3
      %p289 = por %p287, %p288
      %p290 = scmp.ne.s32.totalorder %s282, %s285
      %p291 = scmp.eq.s32.totalorder %s24, 0
      %p292 = por %p290, %p291
      %p293 = scmp.ne.s32.totalorder %s282, %s285
      %p294 = scmp.eq.s32.totalorder %s29, 3
      %p295 = por %p293, %p294
      %p296 = scmp.ne.s32.totalorder %s285, %s286
      %p297 = scmp.eq.s32.totalorder %s29, 0
      %p298 = por %p296, %p297
      %p299 = scmp.ne.s32.totalorder %s285, %s286
      %p300 = scmp.eq.s32.totalorder %s30, 3
      %p301 = por %p299, %p300
      %p303 = scmp.ne.s32.totalorder %s286, %s302
      %p304 = scmp.eq.s32.totalorder %s30, 0
      %p305 = por %p303, %p304
      %s306 = ssub.s32 %s32, %s39
      %p307 = scmp.eq.s32.totalorder %s306, 0
      %s309 = sadd.s32 %s308, 1
      %s310 = scalar_select %p307, %s308, %s309
      %p313 = pneg %p307
      %p314 = scmp.eq.s32.totalorder %s24, 3
      %p315 = por %p313, %p314
      %p316 = scmp.ne.s32.totalorder %s308, %s311
      %p317 = scmp.eq.s32.totalorder %s24, 0
      %p318 = por %p316, %p317
      %p319 = scmp.ne.s32.totalorder %s308, %s311
      %p320 = scmp.eq.s32.totalorder %s29, 3
      %p321 = por %p319, %p320
      %p322 = scmp.ne.s32.totalorder %s311, %s312
      %p323 = scmp.eq.s32.totalorder %s29, 0
      %p324 = por %p322, %p323
      %p325 = scmp.ne.s32.totalorder %s311, %s312
      %p326 = scmp.eq.s32.totalorder %s30, 3
      %p327 = por %p325, %p326
      %p329 = scmp.ne.s32.totalorder %s312, %s328
      %p330 = scmp.eq.s32.totalorder %s30, 0
      %p331 = por %p329, %p330
      %s332 = ssub.s32 %s31, %s43
      %s333 = ssub.s32 %s32, %s39
      %s334 = sor.u32 %s332, %s333
      %p335 = scmp.eq.s32.totalorder %s334, 0
      %s337 = sadd.s32 %s336, 1
      %s338 = scalar_select %p335, %s336, %s337
      %p341 = pneg %p335
      %p342 = scmp.eq.s32.totalorder %s24, 3
      %p343 = por %p341, %p342
      %p344 = scmp.ne.s32.totalorder %s336, %s339
      %p345 = scmp.eq.s32.totalorder %s24, 0
      %p346 = por %p344, %p345
      %p347 = scmp.ne.s32.totalorder %s336, %s339
      %p348 = scmp.eq.s32.totalorder %s29, 3
      %p349 = por %p347, %p348
      %p350 = scmp.ne.s32.totalorder %s339, %s340
      %p351 = scmp.eq.s32.totalorder %s29, 0
      %p352 = por %p350, %p351
      %p353 = scmp.ne.s32.totalorder %s339, %s340
      %p354 = scmp.eq.s32.totalorder %s30, 3
      %p355 = por %p353, %p354
      %p357 = scmp.ne.s32.totalorder %s340, %s356
      %p358 = scmp.eq.s32.totalorder %s30, 0
      %p359 = por %p357, %p358
      %p360 = scmp.le.s32.totalorder 1, %s24
      %p361 = scmp.lt.s32.totalorder %s24, 5
      %p362 = pnand %p360, %p361
      %p363 = pneg %p362
      // Predicated region
      $region9: #{_lambda_.1} parent=5 // pred_check
        _
      $region10: #{_lambda_.1} parent=5 // pred_check_branch
        %365 = sbr.rel (%p362) target = $region12
      $region11: #{_lambda_.1} parent=5 // pred_region
        %s366 = ssub.s32 %s24, 1
        // Predicated region
        $region13: #{_lambda_.1} parent=11 // pred_check
          %p367 = pneg %p83
        $region14: #{_lambda_.1} parent=11 // pred_check_branch
          %369 = sbr.rel (%p367) target = $region16
        $region15: #{_lambda_.1} parent=11 // pred_region
          _
        $region16: #{_lambda_.1} parent=11 // pred_fallthru
          _
        // Predicated region
        $region17: #{_lambda_.1} parent=11 // pred_check
          %p370 = pneg %p104
        $region18: #{_lambda_.1} parent=11 // pred_check_branch
          %372 = sbr.rel (%p370) target = $region20
        $region19: #{_lambda_.1} parent=11 // pred_region
          _
        $region20: #{_lambda_.1} parent=11 // pred_fallthru
          _
        // Predicated region
        $region21: #{_lambda_.1} parent=11 // pred_check
          %p373 = pneg %p125
        $region22: #{_lambda_.1} parent=11 // pred_check_branch
          %375 = sbr.rel (%p373) target = $region24
        $region23: #{_lambda_.1} parent=11 // pred_region
          %s377 = ssub.s32 1024, 1024
          %378 = vsyncadd [#allocation6], %s377
          %s379 = sshll.u32 [#allocation5], 4
          %s380 = int_to_ptr.vmem [resolvable:$true] %s379
          %385 = dma.hbm_to_vmem [thread:$0]  %s3, 1024, %s380, [#allocation6], 64, 64, 4
        $region24: #{_lambda_.1} parent=11 // pred_fallthru
          _
        // Predicated region
        $region25: #{_lambda_.1} parent=11 // pred_check
          %p386 = pneg %p146
        $region26: #{_lambda_.1} parent=11 // pred_check_branch
          %388 = sbr.rel (%p386) target = $region28
        $region27: #{_lambda_.1} parent=11 // pred_region
          _
        $region28: #{_lambda_.1} parent=11 // pred_fallthru
          _
        // Predicated region
        $region29: #{_lambda_.1} parent=11 // pred_check
          %p389 = pneg %p167
        $region30: #{_lambda_.1} parent=11 // pred_check_branch
          %391 = sbr.rel (%p389) target = $region32
        $region31: #{_lambda_.1} parent=11 // pred_region
          %s393 = ssub.s32 1024, 1024
          %394 = vsyncadd [#allocation6], %s393
          %s395 = sshll.u32 [#allocation7], 4
          %s396 = int_to_ptr.vmem [resolvable:$true] %s395
          %401 = dma.hbm_to_vmem [thread:$0]  %s5, 1024, %s396, [#allocation6], 64, 64, 4
        $region32: #{_lambda_.1} parent=11 // pred_fallthru
          _
        // Predicated region
        $region33: #{_lambda_.1} parent=11 // pred_check
          %p402 = pneg %p188
        $region34: #{_lambda_.1} parent=11 // pred_check_branch
          %404 = sbr.rel (%p402) target = $region36
        $region35: #{_lambda_.1} parent=11 // pred_region
          _
        $region36: #{_lambda_.1} parent=11 // pred_fallthru
          _
        // Predicated region
        $region37: #{_lambda_.1} parent=11 // pred_check
          %p405 = pneg %p209
        $region38: #{_lambda_.1} parent=11 // pred_check_branch
          %407 = sbr.rel (%p405) target = $region40
        $region39: #{_lambda_.1} parent=11 // pred_region
          _
        $region40: #{_lambda_.1} parent=11 // pred_fallthru
          _
        // Predicated region
        $region41: #{_lambda_.1} parent=11 // pred_check
          %p408 = pneg %p230
        $region42: #{_lambda_.1} parent=11 // pred_check_branch
          %410 = sbr.rel (%p408) target = $region44
        $region43: #{_lambda_.1} parent=11 // pred_region
          _
        $region44: #{_lambda_.1} parent=11 // pred_fallthru
          _
        // Predicated region
        $region45: #{_lambda_.1} parent=11 // pred_check
          %p411 = pneg %p251
        $region46: #{_lambda_.1} parent=11 // pred_check_branch
          %413 = sbr.rel (%p411) target = $region48
        $region47: #{_lambda_.1} parent=11 // pred_region
          %s415 = ssub.s32 1024, 1024
          %416 = vsyncadd [#allocation9], %s415
          %s417 = sshll.u32 [#allocation8], 4
          %s418 = int_to_ptr.vmem [resolvable:$true] %s417
          %423 = dma.hbm_to_vmem [thread:$0]  %s9, 1024, %s418, [#allocation9], 64, 64, 4
        $region48: #{_lambda_.1} parent=11 // pred_fallthru
          _
        // Predicated region
        $region49: #{_lambda_.1} parent=11 // pred_check
          %p424 = pneg %p272
        $region50: #{_lambda_.1} parent=11 // pred_check_branch
          %426 = sbr.rel (%p424) target = $region52
        $region51: #{_lambda_.1} parent=11 // pred_region
          _
        $region52: #{_lambda_.1} parent=11 // pred_fallthru
          _
      $region12: #{_lambda_.1} parent=5 // pred_fallthru
        _
      %p427 = scmp.lt.s32.totalorder %s24, 4
      // Predicated region
      $region53: #{_lambda_.1} parent=5 // pred_check
        %p428 = pneg %p427
      $region54: #{_lambda_.1} parent=5 // pred_check_branch
        %430 = sbr.rel (%p428) target = $region56
      $region55: #{_lambda_.1} parent=5 // pred_region
        // Predicated region
        $region57: #{_lambda_.1} parent=55 // pred_check
          %p431 = pneg %p56
        $region58: #{_lambda_.1} parent=55 // pred_check_branch
          %433 = sbr.rel (%p431) target = $region60
        $region59: #{_lambda_.1} parent=55 // pred_region
          %s434 = sand.u32 %s24, 1
          %s435 = scalar_lea.sflag [#allocation4], %s434
          %s436 = sand.u32 %s46, 1
          %s437 = smul.addr %s436, 16
          %s438 = scalar_lea.vmem [#allocation3], %s437
          %s439 = smul.u32 2, %s31
          %s441 = ssub.s32 256, 256
          %442 = vsyncadd %s435, %s441
          %s443 = smul.addr %s439, 128
          %s444 = scalar_lea.hbm %s0, %s443
          %s445 = sshll.u32 %s438, 4
          %s446 = int_to_ptr.vmem [resolvable:$true] %s445
          %451 = dma.hbm_to_vmem [thread:$0]  %s444, 256, %s446, %s435, 128, 128, 8
        $region60: #{_lambda_.1} parent=55 // pred_fallthru
          _
        // Predicated region
        $region61: #{_lambda_.1} parent=55 // pred_check
          %p452 = pneg %p292
        $region62: #{_lambda_.1} parent=55 // pred_check_branch
          %454 = sbr.rel (%p452) target = $region64
        $region63: #{_lambda_.1} parent=55 // pred_region
          %s455 = sand.u32 %s24, 1
          %s456 = scalar_lea.sflag [#allocation4], %s455
          %s457 = sand.u32 %s282, 1
          %s458 = smul.addr %s457, 128
          %s459 = scalar_lea.vmem [#allocation10], %s458
          %s460 = smul.u32 2, %s32
          %s462 = ssub.s32 2048, 2048
          %463 = vsyncadd %s456, %s462
          %s464 = smul.addr %s460, 64
          %s465 = scalar_lea.hbm %s11, %s464
          %s466 = sshll.u32 %s459, 4
          %s467 = int_to_ptr.vmem [resolvable:$true] %s466
          %472 = dma.hbm_to_vmem [thread:$0]  %s465, 2048, %s467, %s456, 256, 128, 8
        $region64: #{_lambda_.1} parent=55 // pred_fallthru
          _
        // Predicated region
        $region65: #{_lambda_.1} parent=55 // pred_check
          %p473 = pneg %p318
        $region66: #{_lambda_.1} parent=55 // pred_check_branch
          %475 = sbr.rel (%p473) target = $region68
        $region67: #{_lambda_.1} parent=55 // pred_region
          %s476 = smul.u32 2, %s32
          %p477 = scmp.lt.s32.totalorder %s476, 3
          %s478 = scalar_select %p477, %s476, 3
          %s479 = scalar_lea.vmem %s12, %s478
          %s480 = smul.u32 2, %s32
        $region68: #{_lambda_.1} parent=55 // pred_fallthru
          _
      $region56: #{_lambda_.1} parent=5 // pred_fallthru
        _
      %p481 = scmp.le.s32.totalorder 1, %s24
      %p482 = scmp.lt.s32.totalorder %s24, 5
      %p483 = pnand %p481, %p482
      %p484 = pneg %p483
      // Predicated region
      $region69: #{_lambda_.1} parent=5 // pred_check
        _
      $region70: #{_lambda_.1} parent=5 // pred_check_branch
        %486 = sbr.rel (%p483) target = $region72
      $region71: #{_lambda_.1} parent=5 // pred_region
        %s487 = ssub.s32 %s24, 1
        %s488 = sand.u32 %s29, 1
        %s489 = scalar_lea.sflag [#allocation4], %s488
        %s490 = sand.u32 %s49, 1
        %s491 = smul.addr %s490, 16
        %s492 = scalar_lea.vmem [#allocation3], %s491
        // Predicated region
        $region73: #{_lambda_.1} parent=71 // pred_check
          %p493 = pneg %p62
        $region74: #{_lambda_.1} parent=71 // pred_check_branch
          %495 = sbr.rel (%p493) target = $region76
        $region75: #{_lambda_.1} parent=71 // pred_region
          %496 = dma.done %s489, 256
        $region76: #{_lambda_.1} parent=71 // pred_fallthru
          _
        // Predicated region
        $region77: #{_lambda_.1} parent=71 // pred_check
          %p497 = pneg %p125
        $region78: #{_lambda_.1} parent=71 // pred_check_branch
          %499 = sbr.rel (%p497) target = $region80
        $region79: #{_lambda_.1} parent=71 // pred_region
          %500 = dma.done [#allocation6], 1024
        $region80: #{_lambda_.1} parent=71 // pred_fallthru
          _
        // Predicated region
        $region81: #{_lambda_.1} parent=71 // pred_check
          %p501 = pneg %p167
        $region82: #{_lambda_.1} parent=71 // pred_check_branch
          %503 = sbr.rel (%p501) target = $region84
        $region83: #{_lambda_.1} parent=71 // pred_region
          %504 = dma.done [#allocation6], 1024
        $region84: #{_lambda_.1} parent=71 // pred_fallthru
          _
        // Predicated region
        $region85: #{_lambda_.1} parent=71 // pred_check
          %p505 = pneg %p251
        $region86: #{_lambda_.1} parent=71 // pred_check_branch
          %507 = sbr.rel (%p505) target = $region88
        $region87: #{_lambda_.1} parent=71 // pred_region
          %508 = dma.done [#allocation9], 1024
        $region88: #{_lambda_.1} parent=71 // pred_fallthru
          _
        %s509 = sand.u32 %s29, 1
        %s510 = scalar_lea.sflag [#allocation4], %s509
        %s511 = sand.u32 %s285, 1
        %s512 = smul.addr %s511, 128
        %s513 = scalar_lea.vmem [#allocation10], %s512
        // Predicated region
        $region89: #{_lambda_.1} parent=71 // pred_check
          %p514 = pneg %p298
        $region90: #{_lambda_.1} parent=71 // pred_check_branch
          %516 = sbr.rel (%p514) target = $region92
        $region91: #{_lambda_.1} parent=71 // pred_region
          %517 = dma.done %s510, 2048
        $region92: #{_lambda_.1} parent=71 // pred_fallthru
          _
        %s518 = sand.u32 %s29, 1
        %s519 = scalar_lea.sflag [#allocation4], %s518
        %s520 = sand.u32 %s49, 1
        %s521 = smul.addr %s520, 16
        %s522 = scalar_lea.vmem [#allocation3], %s521
        %p523 = pneg %p62
        %p524 = pneg %p59
        %p525 = pneg %p83
        %p526 = pneg %p80
        %p527 = pneg %p104
        %p528 = pneg %p101
        %p529 = pneg %p125
        %p530 = pneg %p122
        %p531 = pneg %p146
        %p532 = pneg %p143
        %p533 = pneg %p167
        %p534 = pneg %p164
        %p535 = pneg %p188
        %p536 = pneg %p185
        %p537 = pneg %p209
        %p538 = pneg %p206
        %p539 = pneg %p230
        %p540 = pneg %p227
        %p541 = pneg %p251
        %p542 = pneg %p248
        %p543 = pneg %p272
        %p544 = pneg %p269
        %s545 = sand.u32 %s29, 1
        %s546 = scalar_lea.sflag [#allocation4], %s545
        %s547 = sand.u32 %s285, 1
        %s548 = smul.addr %s547, 128
        %s549 = scalar_lea.vmem [#allocation10], %s548
        %p550 = pneg %p298
        %p551 = pneg %p295
        %s552 = smul.u32 2, %s34
        %p553 = scmp.lt.s32.totalorder %s552, 3
        %s554 = scalar_select %p553, %s552, 3
        %s555 = scalar_lea.vmem %s12, %s554
        %p556 = pneg %p324
        %p557 = pneg %p321
        %p558 = pneg %p352
        %p559 = pneg %p349
        %s560 = sand.u32 %s339, 1
        %s561 = sand.u32 %s339, 1
        %s562 = smul.addr %s561, 16
        %s563 = scalar_lea.vmem [#allocation11], %s562
        %s564 = smul.u32 2, %s33
        %s565 = smul.u32 2, %s34
        %s566 = smul.u32 2, %s34
        %p567 = scmp.lt.s32.totalorder %s566, 3
        %s568 = scalar_select %p567, %s566, 3
        %s569 = scalar_lea.vmem %s12, %s568
        %s570 = smul.u32 2, %s34
        %s571 = smul.u32 2, %s33
        %s572 = smul.u32 2, %s34
        %p574 = scmp.eq.s32.totalorder %s34, 0
        // Predicated region
        $region93: #{_lambda_.1} parent=71 // pred_check
          %p575 = pneg %p574
        $region94: #{_lambda_.1} parent=71 // pred_check_branch
          %577 = sbr.rel (%p575) target = $region96
        $region95: #{_lambda_.1} parent=71 // pred_region
          %v578 = vld [vmem:[%s492] sm:$0xff]
          %v579 = vld [vmem:[%s492 + $0x8] sm:$0xff]
          %v580 = vld [vmem:[%s1] sm:$0x1]
          %v581 = vld [vmem:[%s2] sm:$0x1]
          %582 = vadd.xlane.f32.xlu0 %v578
          %v583 = vpop.xlane.xlu0 %582
          %584 = vadd.xlane.f32.xlu0 %v579
          %v585 = vpop.xlane.xlu0 %584
          %v586 = vrcp.pop 128.0
          %v587 = vmul.f32 %v583, %v586
          %v588 = vmul.f32 %v585, %v586
          %v589 = vsub.f32 %v578, %v587
          %v590 = vsub.f32 %v579, %v588
          %v591 = vmul.f32 %v589, %v589
          %v592 = vmul.f32 %v590, %v590
          %593 = vadd.xlane.f32.xlu0 %v591
          %v594 = vpop.xlane.xlu0 %593
          %595 = vadd.xlane.f32.xlu0 %v592
          %v596 = vpop.xlane.xlu0 %595
          %v597 = vmul.f32 %v594, %v586
          %v598 = vmul.f32 %v596, %v586
          %v599 = vadd.f32 %v597, 1e-05
          %v600 = vadd.f32 %v598, 1e-05
          %v601 = vrsqrt.pop %v599
          %v602 = vrsqrt.pop %v600
          %v603 = vmul.f32 %v589, %v601
          %v604 = vmul.f32 %v590, %v602
          %v606 = vlaneseq
          %v607 = vshrl.u32 %v606, 7
          %v608 = vsub.s32 0, %v607
          %v609 = vrot.slane %v580, %v608
          %v611 = vmul.f32 %v603, %v609
          %v612 = vmul.f32 %v604, %v609
          %v614 = vlaneseq
          %v615 = vshrl.u32 %v614, 7
          %v616 = vsub.s32 0, %v615
          %v617 = vrot.slane %v581, %v616
          %v619 = vadd.f32 %v611, %v617
          %v620 = vadd.f32 %v612, %v617
          %v621 = vpack.c.bf16 %v620, %v619
          %v622 = vld [vmem:[#allocation5] sm:$0xf]
          %v623 = vld [vmem:[#allocation5 + $0x4] sm:$0xf]
          %v624 = vld [vmem:[#allocation5 + $0x8] sm:$0xf]
          %v625 = vld [vmem:[#allocation5 + $0xc] sm:$0xf]
          %v626 = vld [vmem:[#allocation5 + $0x10] sm:$0xf]
          %v627 = vld [vmem:[#allocation5 + $0x14] sm:$0xf]
          %v628 = vld [vmem:[#allocation5 + $0x18] sm:$0xf]
          %v629 = vld [vmem:[#allocation5 + $0x1c] sm:$0xf]
          %v630 = vld [vmem:[#allocation5 + $0x20] sm:$0xf]
          %v631 = vld [vmem:[#allocation5 + $0x24] sm:$0xf]
          %v632 = vld [vmem:[#allocation5 + $0x28] sm:$0xf]
          %v633 = vld [vmem:[#allocation5 + $0x2c] sm:$0xf]
          %v634 = vld [vmem:[#allocation5 + $0x30] sm:$0xf]
          %v635 = vld [vmem:[#allocation5 + $0x34] sm:$0xf]
          %v636 = vld [vmem:[#allocation5 + $0x38] sm:$0xf]
          %v637 = vld [vmem:[#allocation5 + $0x3c] sm:$0xf]
          %v638 = vld [vmem:[%s4] sm:$0x1]
          %v640 = vlaneseq
          %v641 = vshrl.u32 %v640, 7
          %v642 = vsub.s32 0, %v641
          %v643 = vrot.slane %v638, %v642
          %v661 = vunpack.c.l.b16 %v622
          %v662 = vunpack.c.l.b16 %v623
          %v663 = vunpack.c.l.b16 %v624
          %v664 = vunpack.c.l.b16 %v625
          %v665 = vunpack.c.l.b16 %v626
          %v666 = vunpack.c.l.b16 %v627
          %v667 = vunpack.c.l.b16 %v628
          %v668 = vunpack.c.l.b16 %v629
          %v669 = vunpack.c.l.b16 %v630
          %v670 = vunpack.c.l.b16 %v631
          %v671 = vunpack.c.l.b16 %v632
          %v672 = vunpack.c.l.b16 %v633
          %v673 = vunpack.c.l.b16 %v634
          %v674 = vunpack.c.l.b16 %v635
          %v675 = vunpack.c.l.b16 %v636
          %v676 = vunpack.c.l.b16 %v637
          %v677 = vpack.c.b16 %v662, %v661
          %v678 = vpack.c.b16 %v664, %v663
          %v679 = vpack.c.b16 %v666, %v665
          %v680 = vpack.c.b16 %v668, %v667
          %v681 = vpack.c.b16 %v670, %v669
          %v682 = vpack.c.b16 %v672, %v671
          %v683 = vpack.c.b16 %v674, %v673
          %v684 = vpack.c.b16 %v676, %v675
          %693 = vmatprep.subr.bf16.mxu0 0
          %694 = vmatpush1.bf16.msra.mxu0 %v684
          %695 = vmatprep.subr.bf16.mxu0 0
          %696 = vmatpush1.bf16.msra.mxu0 %v683
          %697 = vmatprep.subr.bf16.mxu0 0
          %698 = vmatpush1.bf16.msra.mxu0 %v682
          %699 = vmatprep.subr.bf16.mxu0 0
          %700 = vmatpush1.bf16.msra.mxu0 %v681
          %701 = vmatprep.subr.bf16.mxu0 0
          %702 = vmatpush1.bf16.msra.mxu0 %v680
          %703 = vmatprep.subr.bf16.mxu0 0
          %704 = vmatpush1.bf16.msra.mxu0 %v679
          %705 = vmatprep.subr.bf16.mxu0 0
          %706 = vmatpush1.bf16.msra.mxu0 %v678
          %707 = vmatprep.subr.bf16.mxu0 0
          %708 = vmatpush1.bf16.msra.mxu0 %v677
          %709 = vmatprep.subr.bf16.mxu0 0
          %710 = vmatpush2.bf16.msra.mxu0 0
          %711 = vmatprep.subr.bf16.mxu0 0
          %712 = vmatpush2.bf16.msra.mxu0 0
          %713 = vmatprep.subr.bf16.mxu0 0
          %714 = vmatpush2.bf16.msra.mxu0 0
          %715 = vmatprep.subr.bf16.mxu0 0
          %716 = vmatpush2.bf16.msra.mxu0 0
          %717 = vmatprep.subr.bf16.mxu0 0
          %718 = vmatpush2.bf16.msra.mxu0 0
          %719 = vmatprep.subr.bf16.mxu0 0
          %720 = vmatpush2.bf16.msra.mxu0 0
          %721 = vmatprep.subr.bf16.mxu0 0
          %722 = vmatpush2.bf16.msra.mxu0 0
          %723 = vmatprep.subr.bf16.mxu0 0
          %724 = vmatpush2.bf16.msra.mxu0 0
          %725 = vmatprep.mubr.bf16.mxu0 0
          %726 = vmatmul.mubr.bf16.gmra.mxu0 %v621
          %v727 = vpop.f32.mrf.mxu0
          %v728 = vadd.f32 %v643, %v727
          %v729 = vpop.f32.mrf.mxu0
          %v730 = vpop.f32.mrf.mxu0
          %v731 = vadd.f32 %v643, %v730
          %v732 = vpop.f32.mrf.mxu0
          %733 = vdwg.mxu0
          %v734 = vmul.f32 %v728, 0.5
          %v735 = vmul.f32 %v731, 0.5
          %v736 = vmul.f32 %v728, 0.70710677
          %v737 = vmul.f32 %v731, 0.70710677
          %v738 = verf.f32.pop %v736
          %v739 = verf.f32.pop %v737
          %v740 = vadd.f32 %v738, 1.0
          %v741 = vadd.f32 %v739, 1.0
          %v742 = vmul.f32 %v734, %v740
          %v743 = vmul.f32 %v735, %v741
          %v744 = vpack.c.bf16 %v743, %v742
          %v745 = vld [vmem:[#allocation7] sm:$0xf]
          %v746 = vld [vmem:[#allocation7 + $0x4] sm:$0xf]
          %v747 = vld [vmem:[#allocation7 + $0x8] sm:$0xf]
          %v748 = vld [vmem:[#allocation7 + $0xc] sm:$0xf]
          %v749 = vld [vmem:[#allocation7 + $0x10] sm:$0xf]
          %v750 = vld [vmem:[#allocation7 + $0x14] sm:$0xf]
          %v751 = vld [vmem:[#allocation7 + $0x18] sm:$0xf]
          %v752 = vld [vmem:[#allocation7 + $0x1c] sm:$0xf]
          %v753 = vld [vmem:[#allocation7 + $0x20] sm:$0xf]
          %v754 = vld [vmem:[#allocation7 + $0x24] sm:$0xf]
          %v755 = vld [vmem:[#allocation7 + $0x28] sm:$0xf]
          %v756 = vld [vmem:[#allocation7 + $0x2c] sm:$0xf]
          %v757 = vld [vmem:[#allocation7 + $0x30] sm:$0xf]
          %v758 = vld [vmem:[#allocation7 + $0x34] sm:$0xf]
          %v759 = vld [vmem:[#allocation7 + $0x38] sm:$0xf]
          %v760 = vld [vmem:[#allocation7 + $0x3c] sm:$0xf]
          %v761 = vld [vmem:[%s6] sm:$0x1]
          %v763 = vlaneseq
          %v764 = vshrl.u32 %v763, 7
          %v765 = vsub.s32 0, %v764
          %v766 = vrot.slane %v761, %v765
          %v784 = vunpack.c.l.b16 %v745
          %v785 = vunpack.c.l.b16 %v746
          %v786 = vunpack.c.l.b16 %v747
          %v787 = vunpack.c.l.b16 %v748
          %v788 = vunpack.c.l.b16 %v749
          %v789 = vunpack.c.l.b16 %v750
          %v790 = vunpack.c.l.b16 %v751
          %v791 = vunpack.c.l.b16 %v752
          %v792 = vunpack.c.l.b16 %v753
          %v793 = vunpack.c.l.b16 %v754
          %v794 = vunpack.c.l.b16 %v755
          %v795 = vunpack.c.l.b16 %v756
          %v796 = vunpack.c.l.b16 %v757
          %v797 = vunpack.c.l.b16 %v758
          %v798 = vunpack.c.l.b16 %v759
          %v799 = vunpack.c.l.b16 %v760
          %v800 = vpack.c.b16 %v785, %v784
          %v801 = vpack.c.b16 %v787, %v786
          %v802 = vpack.c.b16 %v789, %v788
          %v803 = vpack.c.b16 %v791, %v790
          %v804 = vpack.c.b16 %v793, %v792
          %v805 = vpack.c.b16 %v795, %v794
          %v806 = vpack.c.b16 %v797, %v796
          %v807 = vpack.c.b16 %v799, %v798
          %816 = vmatprep.subr.bf16.mxu0 0
          %817 = vmatpush1.bf16.msra.mxu0 %v807
          %818 = vmatprep.subr.bf16.mxu0 0
          %819 = vmatpush1.bf16.msra.mxu0 %v806
          %820 = vmatprep.subr.bf16.mxu0 0
          %821 = vmatpush1.bf16.msra.mxu0 %v805
          %822 = vmatprep.subr.bf16.mxu0 0
          %823 = vmatpush1.bf16.msra.mxu0 %v804
          %824 = vmatprep.subr.bf16.mxu0 0
          %825 = vmatpush1.bf16.msra.mxu0 %v803
          %826 = vmatprep.subr.bf16.mxu0 0
          %827 = vmatpush1.bf16.msra.mxu0 %v802
          %828 = vmatprep.subr.bf16.mxu0 0
          %829 = vmatpush1.bf16.msra.mxu0 %v801
          %830 = vmatprep.subr.bf16.mxu0 0
          %831 = vmatpush1.bf16.msra.mxu0 %v800
          %832 = vmatprep.subr.bf16.mxu0 0
          %833 = vmatpush2.bf16.msra.mxu0 0
          %834 = vmatprep.subr.bf16.mxu0 0
          %835 = vmatpush2.bf16.msra.mxu0 0
          %836 = vmatprep.subr.bf16.mxu0 0
          %837 = vmatpush2.bf16.msra.mxu0 0
          %838 = vmatprep.subr.bf16.mxu0 0
          %839 = vmatpush2.bf16.msra.mxu0 0
          %840 = vmatprep.subr.bf16.mxu0 0
          %841 = vmatpush2.bf16.msra.mxu0 0
          %842 = vmatprep.subr.bf16.mxu0 0
          %843 = vmatpush2.bf16.msra.mxu0 0
          %844 = vmatprep.subr.bf16.mxu0 0
          %845 = vmatpush2.bf16.msra.mxu0 0
          %846 = vmatprep.subr.bf16.mxu0 0
          %847 = vmatpush2.bf16.msra.mxu0 0
          %848 = vmatprep.mubr.bf16.mxu0 0
          %849 = vmatmul.mubr.bf16.gmra.mxu0 %v744
          %v850 = vpop.f32.mrf.mxu0
          %v851 = vadd.f32 %v766, %v850
          %v852 = vpop.f32.mrf.mxu0
          %v853 = vpop.f32.mrf.mxu0
          %v854 = vadd.f32 %v766, %v853
          %v855 = vpop.f32.mrf.mxu0
          %856 = vdwg.mxu0
          %v857 = vld [vmem:[%s7] sm:$0x1]
          %v858 = vld [vmem:[%s8] sm:$0x1]
          %859 = vadd.xlane.f32.xlu0 %v851
          %v860 = vpop.xlane.xlu0 %859
          %861 = vadd.xlane.f32.xlu0 %v854
          %v862 = vpop.xlane.xlu0 %861
          %v863 = vmul.f32 %v860, %v586
          %v864 = vmul.f32 %v862, %v586
          %v865 = vsub.f32 %v851, %v863
          %v866 = vsub.f32 %v854, %v864
          %v867 = vmul.f32 %v865, %v865
          %v868 = vmul.f32 %v866, %v866
          %869 = vadd.xlane.f32.xlu0 %v867
          %v870 = vpop.xlane.xlu0 %869
          %871 = vadd.xlane.f32.xlu0 %v868
          %v872 = vpop.xlane.xlu0 %871
          %v873 = vmul.f32 %v870, %v586
          %v874 = vmul.f32 %v872, %v586
          %v875 = vadd.f32 %v873, 1e-05
          %v876 = vadd.f32 %v874, 1e-05
          %v877 = vrsqrt.pop %v875
          %v878 = vrsqrt.pop %v876
          %v879 = vmul.f32 %v865, %v877
          %v880 = vmul.f32 %v866, %v878
          %v882 = vlaneseq
          %v883 = vshrl.u32 %v882, 7
          %v884 = vsub.s32 0, %v883
          %v885 = vrot.slane %v857, %v884
          %v887 = vmul.f32 %v879, %v885
          %v888 = vmul.f32 %v880, %v885
          %v890 = vlaneseq
          %v891 = vshrl.u32 %v890, 7
          %v892 = vsub.s32 0, %v891
          %v893 = vrot.slane %v858, %v892
          %v895 = vadd.f32 %v887, %v893
          %v896 = vadd.f32 %v888, %v893
          %v897 = vpack.c.bf16 %v896, %v895
          %v898 = vld [vmem:[#allocation8] sm:$0xf]
          %v899 = vld [vmem:[#allocation8 + $0x4] sm:$0xf]
          %v900 = vld [vmem:[#allocation8 + $0x8] sm:$0xf]
          %v901 = vld [vmem:[#allocation8 + $0xc] sm:$0xf]
          %v902 = vld [vmem:[#allocation8 + $0x10] sm:$0xf]
          %v903 = vld [vmem:[#allocation8 + $0x14] sm:$0xf]
          %v904 = vld [vmem:[#allocation8 + $0x18] sm:$0xf]
          %v905 = vld [vmem:[#allocation8 + $0x1c] sm:$0xf]
          %v906 = vld [vmem:[#allocation8 + $0x20] sm:$0xf]
          %v907 = vld [vmem:[#allocation8 + $0x24] sm:$0xf]
          %v908 = vld [vmem:[#allocation8 + $0x28] sm:$0xf]
          %v909 = vld [vmem:[#allocation8 + $0x2c] sm:$0xf]
          %v910 = vld [vmem:[#allocation8 + $0x30] sm:$0xf]
          %v911 = vld [vmem:[#allocation8 + $0x34] sm:$0xf]
          %v912 = vld [vmem:[#allocation8 + $0x38] sm:$0xf]
          %v913 = vld [vmem:[#allocation8 + $0x3c] sm:$0xf]
          %v914 = vld [vmem:[%s10] sm:$0x1]
          %v916 = vlaneseq
          %v917 = vshrl.u32 %v916, 7
          %v918 = vsub.s32 0, %v917
          %v919 = vrot.slane %v914, %v918
          %v937 = vunpack.c.l.b16 %v898
          %v938 = vunpack.c.l.b16 %v899
          %v939 = vunpack.c.l.b16 %v900
          %v940 = vunpack.c.l.b16 %v901
          %v941 = vunpack.c.l.b16 %v902
          %v942 = vunpack.c.l.b16 %v903
          %v943 = vunpack.c.l.b16 %v904
          %v944 = vunpack.c.l.b16 %v905
          %v945 = vunpack.c.l.b16 %v906
          %v946 = vunpack.c.l.b16 %v907
          %v947 = vunpack.c.l.b16 %v908
          %v948 = vunpack.c.l.b16 %v909
          %v949 = vunpack.c.l.b16 %v910
          %v950 = vunpack.c.l.b16 %v911
          %v951 = vunpack.c.l.b16 %v912
          %v952 = vunpack.c.l.b16 %v913
          %v953 = vpack.c.b16 %v938, %v937
          %v954 = vpack.c.b16 %v940, %v939
          %v955 = vpack.c.b16 %v942, %v941
          %v956 = vpack.c.b16 %v944, %v943
          %v957 = vpack.c.b16 %v946, %v945
          %v958 = vpack.c.b16 %v948, %v947
          %v959 = vpack.c.b16 %v950, %v949
          %v960 = vpack.c.b16 %v952, %v951
          %969 = vmatprep.subr.bf16.mxu0 0
          %970 = vmatpush1.bf16.msra.mxu0 %v960
          %971 = vmatprep.subr.bf16.mxu0 0
          %972 = vmatpush1.bf16.msra.mxu0 %v959
          %973 = vmatprep.subr.bf16.mxu0 0
          %974 = vmatpush1.bf16.msra.mxu0 %v958
          %975 = vmatprep.subr.bf16.mxu0 0
          %976 = vmatpush1.bf16.msra.mxu0 %v957
          %977 = vmatprep.subr.bf16.mxu0 0
          %978 = vmatpush1.bf16.msra.mxu0 %v956
          %979 = vmatprep.subr.bf16.mxu0 0
          %980 = vmatpush1.bf16.msra.mxu0 %v955
          %981 = vmatprep.subr.bf16.mxu0 0
          %982 = vmatpush1.bf16.msra.mxu0 %v954
          %983 = vmatprep.subr.bf16.mxu0 0
          %984 = vmatpush1.bf16.msra.mxu0 %v953
          %985 = vmatprep.subr.bf16.mxu0 0
          %986 = vmatpush2.bf16.msra.mxu0 0
          %987 = vmatprep.subr.bf16.mxu0 0
          %988 = vmatpush2.bf16.msra.mxu0 0
          %989 = vmatprep.subr.bf16.mxu0 0
          %990 = vmatpush2.bf16.msra.mxu0 0
          %991 = vmatprep.subr.bf16.mxu0 0
          %992 = vmatpush2.bf16.msra.mxu0 0
          %993 = vmatprep.subr.bf16.mxu0 0
          %994 = vmatpush2.bf16.msra.mxu0 0
          %995 = vmatprep.subr.bf16.mxu0 0
          %996 = vmatpush2.bf16.msra.mxu0 0
          %997 = vmatprep.subr.bf16.mxu0 0
          %998 = vmatpush2.bf16.msra.mxu0 0
          %999 = vmatprep.subr.bf16.mxu0 0
          %1000 = vmatpush2.bf16.msra.mxu0 0
          %1001 = vmatprep.mubr.bf16.mxu0 0
          %1002 = vmatmul.mubr.bf16.gmra.mxu0 %v897
          %v1003 = vpop.f32.mrf.mxu0
          %v1004 = vadd.f32 %v919, %v1003
          %v1005 = vpop.f32.mrf.mxu0
          %v1006 = vpop.f32.mrf.mxu0
          %v1007 = vadd.f32 %v919, %v1006
          %v1008 = vpop.f32.mrf.mxu0
          %1009 = vdwg.mxu0
          %v1010 = vmul.f32 %v1004, 0.5
          %v1011 = vmul.f32 %v1007, 0.5
          %v1012 = vmul.f32 %v1004, 0.70710677
          %v1013 = vmul.f32 %v1007, 0.70710677
          %v1014 = verf.f32.pop %v1012
          %v1015 = verf.f32.pop %v1013
          %v1016 = vadd.f32 %v1014, 1.0
          %v1017 = vadd.f32 %v1015, 1.0
          %v1018 = vmul.f32 %v1010, %v1016
          %v1019 = vmul.f32 %v1011, %v1017
          %v1020 = vpack.c.bf16 %v1019, %v1018
          %v1022 = vunpack.c.l.b16 %v1020
          %v1023 = vunpack.c.h.b16 %v1020
          %v1024 = vpack.c.b16 %v1022, %v1022
          %v1025 = vpack.c.b16 %v1023, %v1023
          %1028 = vst [vmem:[#allocation2] sm:$0xf] %v1024
          %1029 = vst [vmem:[#allocation2 + $0x4] sm:$0xf] %v1025
        $region96: #{_lambda_.1} parent=71 // pred_fallthru
          _
        %v1030 = vld [vmem:[#allocation2] sm:$0xf]
        %v1031 = vld [vmem:[#allocation2 + $0x4] sm:$0xf]
        %v1032 = vld [vmem:[%s513] sm:$0xff]
        %v1033 = vld [vmem:[%s513 + $0x8] sm:$0xff]
        %v1034 = vld [vmem:[%s513 + $0x10] sm:$0xff]
        %v1035 = vld [vmem:[%s513 + $0x18] sm:$0xff]
        %v1036 = vld [vmem:[%s513 + $0x20] sm:$0xff]
        %v1037 = vld [vmem:[%s513 + $0x28] sm:$0xff]
        %v1038 = vld [vmem:[%s513 + $0x30] sm:$0xff]
        %v1039 = vld [vmem:[%s513 + $0x38] sm:$0xff]
        %v1040 = vld [vmem:[%s513 + $0x40] sm:$0xff]
        %v1041 = vld [vmem:[%s513 + $0x48] sm:$0xff]
        %v1042 = vld [vmem:[%s513 + $0x50] sm:$0xff]
        %v1043 = vld [vmem:[%s513 + $0x58] sm:$0xff]
        %v1044 = vld [vmem:[%s513 + $0x60] sm:$0xff]
        %v1045 = vld [vmem:[%s513 + $0x68] sm:$0xff]
        %v1046 = vld [vmem:[%s513 + $0x70] sm:$0xff]
        %v1047 = vld [vmem:[%s513 + $0x78] sm:$0xff]
        %v1048 = vld [vmem:[%s569] sm:$0x3]
        %v1050 = vlaneseq
        %v1051 = vshrl.u32 %v1050, 7
        %v1052 = vsub.s32 0, %v1051
        %v1053 = vrot.slane %v1048, %v1052
        %v1054 = vlaneseq
        %v1055 = vshrl.u32 %v1054, 7
        %v1056 = vsub.s32 1, %v1055
        %v1057 = vrot.slane %v1048, %v1056
        %v1062 = vunpack.c.l.b16 %v1030
        %v1063 = vunpack.c.l.b16 %v1031
        %v1064 = vpack.c.b16 %v1063, %v1062
        %v1082 = vunpack.c.l.b16 %v1032
        %v1083 = vunpack.c.h.b16 %v1032
        %v1084 = vunpack.c.l.b16 %v1033
        %v1085 = vunpack.c.h.b16 %v1033
        %v1086 = vunpack.c.l.b16 %v1034
        %v1087 = vunpack.c.h.b16 %v1034
        %v1088 = vunpack.c.l.b16 %v1035
        %v1089 = vunpack.c.h.b16 %v1035
        %v1090 = vunpack.c.l.b16 %v1036
        %v1091 = vunpack.c.h.b16 %v1036
        %v1092 = vunpack.c.l.b16 %v1037
        %v1093 = vunpack.c.h.b16 %v1037
        %v1094 = vunpack.c.l.b16 %v1038
        %v1095 = vunpack.c.h.b16 %v1038
        %v1096 = vunpack.c.l.b16 %v1039
        %v1097 = vunpack.c.h.b16 %v1039
        %v1098 = vunpack.c.l.b16 %v1040
        %v1099 = vunpack.c.h.b16 %v1040
        %v1100 = vunpack.c.l.b16 %v1041
        %v1101 = vunpack.c.h.b16 %v1041
        %v1102 = vunpack.c.l.b16 %v1042
        %v1103 = vunpack.c.h.b16 %v1042
        %v1104 = vunpack.c.l.b16 %v1043
        %v1105 = vunpack.c.h.b16 %v1043
        %v1106 = vunpack.c.l.b16 %v1044
        %v1107 = vunpack.c.h.b16 %v1044
        %v1108 = vunpack.c.l.b16 %v1045
        %v1109 = vunpack.c.h.b16 %v1045
        %v1110 = vunpack.c.l.b16 %v1046
        %v1111 = vunpack.c.h.b16 %v1046
        %v1112 = vunpack.c.l.b16 %v1047
        %v1113 = vunpack.c.h.b16 %v1047
        %v1114 = vpack.c.b16 %v1084, %v1082
        %v1115 = vpack.c.b16 %v1085, %v1083
        %v1116 = vpack.c.b16 %v1088, %v1086
        %v1117 = vpack.c.b16 %v1089, %v1087
        %v1118 = vpack.c.b16 %v1092, %v1090
        %v1119 = vpack.c.b16 %v1093, %v1091
        %v1120 = vpack.c.b16 %v1096, %v1094
        %v1121 = vpack.c.b16 %v1097, %v1095
        %v1122 = vpack.c.b16 %v1100, %v1098
        %v1123 = vpack.c.b16 %v1101, %v1099
        %v1124 = vpack.c.b16 %v1104, %v1102
        %v1125 = vpack.c.b16 %v1105, %v1103
        %v1126 = vpack.c.b16 %v1108, %v1106
        %v1127 = vpack.c.b16 %v1109, %v1107
        %v1128 = vpack.c.b16 %v1112, %v1110
        %v1129 = vpack.c.b16 %v1113, %v1111
        %1146 = vmatprep.subr.bf16.mxu0 %v1129
        %1147 = vmatpush1.bf16.msra.mxu0 %v1128
        %1148 = vmatprep.subr.bf16.mxu0 %v1127
        %1149 = vmatpush1.bf16.msra.mxu0 %v1126
        %1150 = vmatprep.subr.bf16.mxu0 %v1125
        %1151 = vmatpush1.bf16.msra.mxu0 %v1124
        %1152 = vmatprep.subr.bf16.mxu0 %v1123
        %1153 = vmatpush1.bf16.msra.mxu0 %v1122
        %1154 = vmatprep.subr.bf16.mxu0 %v1121
        %1155 = vmatpush1.bf16.msra.mxu0 %v1120
        %1156 = vmatprep.subr.bf16.mxu0 %v1119
        %1157 = vmatpush1.bf16.msra.mxu0 %v1118
        %1158 = vmatprep.subr.bf16.mxu0 %v1117
        %1159 = vmatpush1.bf16.msra.mxu0 %v1116
        %1160 = vmatprep.subr.bf16.mxu0 %v1115
        %1161 = vmatpush1.bf16.msra.mxu0 %v1114
        %1162 = vmatprep.subr.bf16.mxu0 0
        %1163 = vmatpush2.bf16.msra.mxu0 0
        %1164 = vmatprep.subr.bf16.mxu0 0
        %1165 = vmatpush2.bf16.msra.mxu0 0
        %1166 = vmatprep.subr.bf16.mxu0 0
        %1167 = vmatpush2.bf16.msra.mxu0 0
        %1168 = vmatprep.subr.bf16.mxu0 0
        %1169 = vmatpush2.bf16.msra.mxu0 0
        %1170 = vmatprep.subr.bf16.mxu0 0
        %1171 = vmatpush2.bf16.msra.mxu0 0
        %1172 = vmatprep.subr.bf16.mxu0 0
        %1173 = vmatpush2.bf16.msra.mxu0 0
        %1174 = vmatprep.subr.bf16.mxu0 0
        %1175 = vmatpush2.bf16.msra.mxu0 0
        %1176 = vmatprep.subr.bf16.mxu0 0
        %1177 = vmatpush2.bf16.msra.mxu0 0
        %1178 = vmatprep.mubr.bf16.mxu0 0
        %1179 = vmatmul.mubr.bf16.gmra.mxu0 %v1064
        %v1180 = vpop.f32.mrf.mxu0
        %v1181 = vadd.f32 %v1053, %v1180
        %v1182 = vpop.f32.mrf.mxu0
        %v1183 = vadd.f32 %v1057, %v1182
        %v1184 = vpop.f32.mrf.mxu0
        %v1185 = vadd.f32 %v1053, %v1184
        %v1186 = vpop.f32.mrf.mxu0
        %v1187 = vadd.f32 %v1057, %v1186
        %1188 = vdwg.mxu0
        %v1189 = vpack.c.bf16 %v1185, %v1181
        %v1190 = vpack.c.bf16 %v1187, %v1183
        %v1193 = vunpack.c.l.b16 %v1189
        %v1194 = vunpack.c.l.b16 %v1190
        %v1195 = vunpack.c.h.b16 %v1189
        %v1196 = vunpack.c.h.b16 %v1190
        %v1197 = vpack.c.b16 %v1194, %v1193
        %v1198 = vpack.c.b16 %v1196, %v1195
        %1201 = vst [vmem:[%s563] sm:$0xff] %v1197
        %1202 = vst [vmem:[%s563 + $0x8] sm:$0xff] %v1198
        %s1203 = sand.u32 %s339, 1
        %s1204 = sand.u32 %s339, 1
        %s1205 = smul.addr %s1204, 16
        %s1206 = scalar_lea.vmem [#allocation11], %s1205
        // Predicated region
        $region97: #{_lambda_.1} parent=71 // pred_check
          %p1207 = pneg %p349
        $region98: #{_lambda_.1} parent=71 // pred_check_branch
          %1209 = sbr.rel (%p1207) target = $region100
        $region99: #{_lambda_.1} parent=71 // pred_region
          %s1210 = smul.u32 2, %s33
          %s1211 = smul.u32 2, %s34
          %s1212 = smul.addr %s1210, 4
          %s1213 = sadd.s32 %s1211, %s1212
          %s1214 = smul.addr %s1213, 4
          %s1215 = scalar_lea.vmem %s13, %s1214
          // Predicated region
          $region101: #{_lambda_.1} parent=99 // pred_check
            _
          $region102: #{_lambda_.1} parent=99 // pred_check_branch
            %1217 = sbr.rel (0) target = $region104
          $region103: #{_lambda_.1} parent=99 // pred_region
            // Predicated region
            $region105: #{_lambda_.1} parent=103 // pred_check
              _
            $region106: #{_lambda_.1} parent=103 // pred_check_branch
              %1219 = sbr.rel (0) target = $region108
            $region107: #{_lambda_.1} parent=103 // pred_region
              // Predicated region
              $region120: #{_lambda_.1} parent=107 // pred_check
                _
              $region121: #{_lambda_.1} parent=107 // pred_check_branch
                %1237 = sbr.rel (0) target = $region123
              $region122: #{_lambda_.1} parent=107 // pred_region
                loop: start=0, step=1, limit=1
                $region124: #{_lambda_.1} parent=122 // loop_pre_header
                  _
                $region125: #{_lambda_.1} parent=122 // loop_header
                  %s1239 = sphi 0, %s1243
                  %p1240 = scmp.ge.s32.totalorder %s1239, 1
                  %s1244 = sphi %s1206, %s1206
                  %s1245 = sphi %s1215, %s1215
                $region126: #{_lambda_.1} parent=122 // loop_header_branch
                  %1242 = sbr.rel (%p1240) target = $region130
                $region127: #{_lambda_.1} parent=122 // loop_body
                  %v1246 = vld [vmem:[%s1244] sm:$0xff]
                  %1247 = vst [vmem:[%s1245] sm:$0xff] %v1246
                  %v1248 = vld [vmem:[%s1244 + $0x8] sm:$0xff]
                  %1249 = vst [vmem:[%s1245 + $0x10] sm:$0xff] %v1248
                $region128: #{_lambda_.1} parent=122 // loop_footer
                  %s1243 = sadd.s32 1, %s1239
                $region129: #{_lambda_.1} parent=122 // loop_footer_branch
                  %1238 = sbr.rel target = $region125
                $region130: #{_lambda_.1} parent=122 // loop_exit
                  _
              $region123: #{_lambda_.1} parent=107 // pred_fallthru
                _
              // Predicated region
              $region131: #{_lambda_.1} parent=107 // pred_check
                _
              $region132: #{_lambda_.1} parent=107 // pred_check_branch
                %1251 = sbr.rel target = $region134
              $region133: #{_lambda_.1} parent=107 // pred_region
                _
              $region134: #{_lambda_.1} parent=107 // pred_fallthru
                _
            $region108: #{_lambda_.1} parent=103 // pred_fallthru
              _
            // Predicated region
            $region109: #{_lambda_.1} parent=103 // pred_check
              _
            $region110: #{_lambda_.1} parent=103 // pred_check_branch
              %1221 = sbr.rel target = $region112
            $region111: #{_lambda_.1} parent=103 // pred_region
              %s1223 = ssub.s32 256, 1
              loop: start=0, step=1, limit=1
              $region113: #{_lambda_.1} parent=111 // loop_pre_header
                _
              $region114: #{_lambda_.1} parent=111 // loop_header
                %s1225 = sphi 0, %s1229
                %p1226 = scmp.ge.s32.totalorder %s1225, 1
                %s1230 = sphi %s1206, %s1206
                %s1231 = sphi %s1215, %s1215
              $region115: #{_lambda_.1} parent=111 // loop_header_branch
                %1228 = sbr.rel (%p1226) target = $region119
              $region116: #{_lambda_.1} parent=111 // loop_body
                %v1232 = vld [vmem:[%s1230] sm:%s1223]
                %1233 = vst [vmem:[%s1231] sm:%s1223] %v1232
                %v1234 = vld [vmem:[%s1230 + $0x8] sm:%s1223]
                %1235 = vst [vmem:[%s1231 + $0x10] sm:%s1223] %v1234
              $region117: #{_lambda_.1} parent=111 // loop_footer
                %s1229 = sadd.s32 1, %s1225
              $region118: #{_lambda_.1} parent=111 // loop_footer_branch
                %1224 = sbr.rel target = $region114
              $region119: #{_lambda_.1} parent=111 // loop_exit
                _
            $region112: #{_lambda_.1} parent=103 // pred_fallthru
              _
          $region104: #{_lambda_.1} parent=99 // pred_fallthru
            _
          %1252 = vnop
        $region100: #{_lambda_.1} parent=71 // pred_fallthru
          _
      $region72: #{_lambda_.1} parent=5 // pred_fallthru
        _
      %p1253 = scmp.le.s32.totalorder 2, %s24
      // Predicated region
      $region135: #{_lambda_.1} parent=5 // pred_check
        %p1254 = pneg %p1253
      $region136: #{_lambda_.1} parent=5 // pred_check_branch
        %1256 = sbr.rel (%p1254) target = $region138
      $region137: #{_lambda_.1} parent=5 // pred_region
        %s1257 = ssub.s32 %s24, 2
        // Predicated region
        $region139: #{_lambda_.1} parent=137 // pred_check
          %p1258 = pneg %p355
        $region140: #{_lambda_.1} parent=137 // pred_check_branch
          %1260 = sbr.rel (%p1258) target = $region142
        $region141: #{_lambda_.1} parent=137 // pred_region
          %s1261 = sand.u32 %s340, 1
          %s1262 = sand.u32 %s340, 1
          %s1263 = smul.addr %s1262, 16
          %s1264 = scalar_lea.vmem [#allocation11], %s1263
        $region142: #{_lambda_.1} parent=137 // pred_fallthru
          _
      $region138: #{_lambda_.1} parent=5 // pred_fallthru
        _
    $region6: #{_lambda_.1} parent=1 // loop_footer
      %s28 = sadd.s32 1, %s24
    $region7: #{_lambda_.1} parent=1 // loop_footer_branch
      %23 = sbr.rel target = $region3
    $region8: #{_lambda_.1} parent=1 // loop_exit
      _
    %1265 = vsyncpa [#allocation4], 1
    %s1266 = scalar_lea.sflag [#allocation4], 1
    %1267 = vsyncpa %s1266, 1
    %1268 = vsyncpa [#allocation6], 1
    %1269 = vsyncpa [#allocation9], 1

</llo_original>
